<compile_context>
chip_gen: v7x
topology: tpu7x:2x2x1
jax: 0.10.0
libtpu: 0.0.40
codegen_flags: <defaults>
</compile_context>

<pallas_src>
import jax
import jax.numpy as jnp
from jax.experimental import pallas as pl
from jax.experimental.pallas import tpu as pltpu


EMB_DIMS = 32
HID_DIMS = 32          # residual add in the reference forward requires hid_dims == emb_dims
GNN_LAYERS = 2
NODE_VOC = 50
POS_VOC = 20
NODE_VOC_PAD = 64      # node vocab rows in the packed table
POS_VOC_PAD = 64       # pos vocab rows in the packed table
VOC_TOT = NODE_VOC_PAD + POS_VOC_PAD   # 128
N_NODES = 64
N_EDGES = 128
LN_EPS = 1e-5


def _layer_norm(x, gamma, beta):
    mean = jnp.mean(x, axis=-1, keepdims=True)
    var = jnp.mean((x - mean) ** 2, axis=-1, keepdims=True)
    return (x - mean) * jax.lax.rsqrt(var + LN_EPS) * gamma + beta


# ----------------------------------------------------------------------------
# Fused kernel: in-kernel one-hot embedding gather + LN, in-kernel dense
# adjacency, 2x (SAGEConv + ReLU + residual + LayerNorm).
# ----------------------------------------------------------------------------
def fused_ast_enc_kernel(edge_ref, ids_ref, table_ref, w_ref, vec_ref, out_ref):
    vec = vec_ref[...]                                     # (8, D) packed small vectors

    # --- fused embedding gather: scaled node emb + pos emb in ONE MXU pass ----
    ids = ids_ref[...]                                     # (N, 2) int32
    node_col = ids[:, 0:1]                                 # (N, 1) node ids   in [0, 64)
    pos_col = ids[:, 1:2] + NODE_VOC_PAD                   # (N, 1) pos ids -> rows [64, 128)
    iota_v = jax.lax.broadcasted_iota(jnp.int32, (N_NODES, VOC_TOT), 1)
    # two disjoint one-hots per row (node ids < 64 <= shifted pos ids)
    oh = ((iota_v == node_col) | (iota_v == pos_col)).astype(jnp.float32)   # (N, VOC_TOT)
    # table rows [0,64): node table * sqrt(D); rows [64,128): pos table (padding_idx 0 zeroed)
    x = jnp.dot(oh, table_ref[...], preferred_element_type=jnp.float32)     # (N, D)
    x = _layer_norm(x, vec[0:1, :], vec[1:2, :])

    # --- dense adjacency built in-kernel from edge_index ----------------------
    # adj[dst, src] = number of edges (src -> dst); duplicates accumulate (aggr='add').
    # One-hots are exact in bf16 -> native MXU path; f32 accumulation keeps exact counts.
    edge = edge_ref[...]                                   # (2, E) int32
    iota_n = jax.lax.broadcasted_iota(jnp.int32, (N_NODES, N_EDGES), 0)
    oh_src = (iota_n == edge[0:1, :]).astype(jnp.bfloat16)  # (N, E)
    oh_dst = (iota_n == edge[1:2, :]).astype(jnp.bfloat16)  # (N, E)
    adj = jax.lax.dot_general(oh_dst, oh_src,
                              (((1,), (1,)), ((), ())),
                              preferred_element_type=jnp.float32)            # (N, N)

    # --- GNN layers (statically unrolled) --------------------------------------
    for i in range(GNN_LAYERS):
        wl = w_ref[(2 * i) * EMB_DIMS:(2 * i + 1) * EMB_DIMS, :]             # (D, D)
        wr = w_ref[(2 * i + 1) * EMB_DIMS:(2 * i + 2) * EMB_DIMS, :]         # (D, D)
        b_l = vec[2 + 3 * i:3 + 3 * i, :]
        gamma = vec[3 + 3 * i:4 + 3 * i, :]
        beta = vec[4 + 3 * i:5 + 3 * i, :]

        agg = jnp.dot(adj, x, preferred_element_type=jnp.float32)            # sum aggregation
        h = (jnp.dot(agg, wl, preferred_element_type=jnp.float32)
             + jnp.dot(x, wr, preferred_element_type=jnp.float32)
             + b_l)
        h = jnp.maximum(h, 0.0)                            # ReLU (dropout = identity in eval)
        x = _layer_norm(h + x, gamma, beta)                # residual + LayerNorm

    # --- store: natural (64, 32) full block (no packing, no wrapper unpack) ----
    out_ref[...] = x


def fused_ast_enc(edge_index, ids, table_cat, w_cat, vecs):
    vmem = pl.BlockSpec(memory_space=pltpu.MemorySpace.VMEM)
    cost = pl.CostEstimate(flops=2_621_440, transcendentals=192, bytes_accessed=43_520)
    return pl.pallas_call(
        fused_ast_enc_kernel,
        out_shape=jax.ShapeDtypeStruct((N_NODES, EMB_DIMS), jnp.float32),
        in_specs=[vmem] * 5,
        out_specs=vmem,
        cost_estimate=cost,
    )(edge_index, ids, table_cat, w_cat, vecs)


# ----------------------------------------------------------------------------
# Parameter construction (deterministic, synthetic) + packing for the kernel
# ----------------------------------------------------------------------------
def init_params(key):
    ks = jax.random.split(key, 8)
    params = {}
    # embeddings
    params["node_emb_table"] = jax.random.normal(ks[0], (NODE_VOC, EMB_DIMS), jnp.float32)
    pos_tab = jax.random.uniform(ks[1], (POS_VOC, EMB_DIMS), jnp.float32, -0.1, 0.1)
    params["pos_emb_table"] = pos_tab.at[0].set(0.0)          # padding_idx = 0
    # embedding LayerNorm
    params["emb_ln_gamma"] = jnp.ones((1, EMB_DIMS), jnp.float32)
    params["emb_ln_beta"] = jnp.zeros((1, EMB_DIMS), jnp.float32)
    # SAGEConv layers (lin_l with bias, lin_r without), weights stored (D_in, D_out)
    dims = [(EMB_DIMS, HID_DIMS), (HID_DIMS, EMB_DIMS)]
    params["gnn"] = []
    for i, (din, dout) in enumerate(dims):
        k1, k2 = jax.random.split(ks[2 + i], 2)
        scale = 1.0 / jnp.sqrt(jnp.float32(din))
        params["gnn"].append({
            "w_l": jax.random.uniform(k1, (din, dout), jnp.float32, -scale, scale),
            "b_l": jnp.zeros((1, dout), jnp.float32),
            "w_r": jax.random.uniform(k2, (din, dout), jnp.float32, -scale, scale),
            "ln_gamma": jnp.ones((1, dout), jnp.float32),
            "ln_beta": jnp.zeros((1, dout), jnp.float32),
        })

    # ---- packed parameters for the fused kernel ----
    # vocab table (128, 32): rows [0,64) node table pre-scaled by sqrt(D) (padded 50->64),
    #                        rows [64,128) pos table (padded 20->64, row 0 already zero).
    node_pad = jnp.zeros((NODE_VOC_PAD, EMB_DIMS), jnp.float32).at[:NODE_VOC].set(
        params["node_emb_table"] * jnp.sqrt(jnp.float32(EMB_DIMS)))
    pos_pad = jnp.zeros((POS_VOC_PAD, EMB_DIMS), jnp.float32).at[:POS_VOC].set(
        params["pos_emb_table"])
    params["table_cat"] = jnp.concatenate([node_pad, pos_pad], axis=0)        # (128, 32)
    # weight slab (128, 32): [W_l0; W_r0; W_l1; W_r1]
    params["w_cat"] = jnp.concatenate(
        [jnp.concatenate([l["w_l"], l["w_r"]], axis=0) for l in params["gnn"]], axis=0)
    # small-vector slab (8, 32): [emb_gamma, emb_beta, (b_l, gamma, beta) per layer]
    params["vecs"] = jnp.concatenate(
        [params["emb_ln_gamma"], params["emb_ln_beta"]]
        + [jnp.concatenate([l["b_l"], l["ln_gamma"], l["ln_beta"]], axis=0)
           for l in params["gnn"]],
        axis=0)
    return params


# ----------------------------------------------------------------------------
# Full forward (jitted).  The only XLA glue around the single Pallas call is
# one tiny int32 stack of the two id vectors.
# ----------------------------------------------------------------------------
@jax.jit
def ast_enc_forward(params, node_ids, pos_ids, edge_index):
    ids = jnp.stack([node_ids, pos_ids], axis=1).astype(jnp.int32)   # (N, 2)
    return fused_ast_enc(edge_index.astype(jnp.int32), ids,
                         params["table_cat"], params["w_cat"], params["vecs"])


# ----------------------------------------------------------------------------
# Pure-JAX reference (uses the unpacked parameters) for a correctness check
# ----------------------------------------------------------------------------
def ast_enc_reference(params, node_ids, pos_ids, edge_index):
    node_emb = jnp.take(params["node_emb_table"], node_ids, axis=0)
    pos_emb = jnp.take(params["pos_emb_table"], pos_ids, axis=0)
    src, dst = edge_index[0], edge_index[1]
    adj = jnp.zeros((N_NODES, N_NODES), jnp.float32).at[dst, src].add(1.0)

    x = node_emb * jnp.sqrt(jnp.float32(EMB_DIMS)) + pos_emb
    x = _layer_norm(x, params["emb_ln_gamma"], params["emb_ln_beta"])
    for layer in params["gnn"]:
        agg = adj @ x
        h = agg @ layer["w_l"] + layer["b_l"] + x @ layer["w_r"]
        h = jnp.maximum(h, 0.0)
        x = _layer_norm(h + x, layer["ln_gamma"], layer["ln_beta"])
    return x


if __name__ == "__main__":
    key = jax.random.PRNGKey(0)
    k_par, k_node, k_pos, k_edge = jax.random.split(key, 4)

    params = init_params(k_par)

    node_ids = jax.random.randint(k_node, (N_NODES,), 1, NODE_VOC, jnp.int32)
    pos_ids = jax.random.randint(k_pos, (N_NODES,), 0, POS_VOC, jnp.int32)
    edge_index = jax.random.randint(k_edge, (2, N_EDGES), 0, N_NODES, jnp.int32)

    out = ast_enc_forward(params, node_ids, pos_ids, edge_index)
    out = jax.block_until_ready(out)

    ref = ast_enc_reference(params, node_ids, pos_ids, edge_index)
    ref = jax.block_until_ready(ref)

    assert out.shape == (N_NODES, EMB_DIMS), out.shape
    assert jnp.allclose(out, ref, atol=1e-4, rtol=1e-4), "mismatch vs reference"

    print("KERNEL_OK")
</pallas_src>

<mosaic_0001>
module attributes {stable_mosaic.version = 11 : i64} {
  func.func @fused_ast_enc_kernel(%arg0: memref<2x128xi32, #tpu.memory_space<vmem>>, %arg1: memref<64x2xi32, #tpu.memory_space<vmem>>, %arg2: memref<128x32xf32, #tpu.memory_space<vmem>>, %arg3: memref<128x32xf32, #tpu.memory_space<vmem>>, %arg4: memref<8x32xf32, #tpu.memory_space<vmem>>, %arg5: memref<64x32xf32, #tpu.memory_space<vmem>>) attributes {dimension_semantics = [], scalar_prefetch = 0 : i64, scratch_operands = 0 : i64, tpu.core_type = #tpu.core_type<tc>} {
    %c0 = arith.constant 0 : index
    %c0_0 = arith.constant 0 : index
    %0 = vector.load %arg4[%c0, %c0_0] : memref<8x32xf32, #tpu.memory_space<vmem>>, vector<8x32xf32>
    %c0_1 = arith.constant 0 : index
    %c0_2 = arith.constant 0 : index
    %1 = vector.load %arg1[%c0_1, %c0_2] : memref<64x2xi32, #tpu.memory_space<vmem>>, vector<64x2xi32>
    %2 = vector.extract_strided_slice %1 {offsets = [0, 0], sizes = [64, 1], strides = [1, 1]} : vector<64x2xi32> to vector<64x1xi32>
    %3 = vector.extract_strided_slice %1 {offsets = [0, 1], sizes = [64, 1], strides = [1, 1]} : vector<64x2xi32> to vector<64x1xi32>
    %c64_i32 = arith.constant 64 : i32
    %4 = vector.broadcast %c64_i32 : i32 to vector<64x1xi32>
    %5 = arith.addi %3, %4 : vector<64x1xi32>
    %6 = tpu.iota {dimensions = array<i32: 1>} : vector<64x128xi32>
    %7 = vector.broadcast %2 : vector<64x1xi32> to vector<64x128xi32>
    %8 = arith.cmpi eq, %6, %7 : vector<64x128xi32>
    %9 = vector.broadcast %5 : vector<64x1xi32> to vector<64x128xi32>
    %10 = arith.cmpi eq, %6, %9 : vector<64x128xi32>
    %11 = arith.ori %8, %10 : vector<64x128xi1>
    %12 = arith.extui %11 : vector<64x128xi1> to vector<64x128xi32>
    %13 = arith.sitofp %12 : vector<64x128xi32> to vector<64x128xf32>
    %c0_3 = arith.constant 0 : index
    %c0_4 = arith.constant 0 : index
    %14 = vector.load %arg2[%c0_3, %c0_4] : memref<128x32xf32, #tpu.memory_space<vmem>>, vector<128x32xf32>
    %cst = arith.constant dense<0.000000e+00> : vector<64x32xf32>
    %15 = tpu.matmul %13, %14, %cst {dimension_numbers = #tpu.dot_dimension_numbers<[1], [0], [0], [1], [0, 0, 1, 1], [], []>} : vector<64x128xf32>, vector<128x32xf32>, vector<64x32xf32> -> vector<64x32xf32>
    %16 = vector.extract_strided_slice %0 {offsets = [0, 0], sizes = [1, 32], strides = [1, 1]} : vector<8x32xf32> to vector<1x32xf32>
    %17 = vector.extract_strided_slice %0 {offsets = [1, 0], sizes = [1, 32], strides = [1, 1]} : vector<8x32xf32> to vector<1x32xf32>
    %cst_5 = arith.constant dense<0.000000e+00> : vector<64xf32>
    %18 = vector.multi_reduction <add>, %15, %cst_5 [1] : vector<64x32xf32> to vector<64xf32>
    %19 = vector.shape_cast %18 : vector<64xf32> to vector<64x1xf32>
    %cst_6 = arith.constant 3.200000e+01 : f32
    %20 = vector.broadcast %cst_6 : f32 to vector<64x1xf32>
    %21 = arith.divf %19, %20 : vector<64x1xf32>
    %22 = vector.broadcast %21 : vector<64x1xf32> to vector<64x32xf32>
    %23 = arith.subf %15, %22 : vector<64x32xf32>
    %24 = arith.mulf %23, %23 : vector<64x32xf32>
    %cst_7 = arith.constant dense<0.000000e+00> : vector<64xf32>
    %25 = vector.multi_reduction <add>, %24, %cst_7 [1] : vector<64x32xf32> to vector<64xf32>
    %26 = vector.shape_cast %25 : vector<64xf32> to vector<64x1xf32>
    %cst_8 = arith.constant 3.200000e+01 : f32
    %27 = vector.broadcast %cst_8 : f32 to vector<64x1xf32>
    %28 = arith.divf %26, %27 : vector<64x1xf32>
    %29 = vector.broadcast %21 : vector<64x1xf32> to vector<64x32xf32>
    %30 = arith.subf %15, %29 : vector<64x32xf32>
    %cst_9 = arith.constant 9.99999974E-6 : f32
    %31 = vector.broadcast %cst_9 : f32 to vector<64x1xf32>
    %32 = arith.addf %28, %31 : vector<64x1xf32>
    %33 = math.rsqrt %32 : vector<64x1xf32>
    %34 = vector.broadcast %33 : vector<64x1xf32> to vector<64x32xf32>
    %35 = arith.mulf %30, %34 : vector<64x32xf32>
    %36 = vector.broadcast %16 : vector<1x32xf32> to vector<64x32xf32>
    %37 = arith.mulf %35, %36 : vector<64x32xf32>
    %38 = vector.broadcast %17 : vector<1x32xf32> to vector<64x32xf32>
    %39 = arith.addf %37, %38 : vector<64x32xf32>
    %c0_10 = arith.constant 0 : index
    %c0_11 = arith.constant 0 : index
    %40 = vector.load %arg0[%c0_10, %c0_11] : memref<2x128xi32, #tpu.memory_space<vmem>>, vector<2x128xi32>
    %41 = tpu.iota {dimensions = array<i32: 0>} : vector<64x128xi32>
    %42 = vector.extract_strided_slice %40 {offsets = [0, 0], sizes = [1, 128], strides = [1, 1]} : vector<2x128xi32> to vector<1x128xi32>
    %43 = vector.broadcast %42 : vector<1x128xi32> to vector<64x128xi32>
    %44 = arith.cmpi eq, %41, %43 : vector<64x128xi32>
    %45 = arith.extui %44 : vector<64x128xi1> to vector<64x128xi32>
    %46 = arith.sitofp %45 : vector<64x128xi32> to vector<64x128xf32>
    %47 = arith.truncf %46 : vector<64x128xf32> to vector<64x128xbf16>
    %48 = vector.extract_strided_slice %40 {offsets = [1, 0], sizes = [1, 128], strides = [1, 1]} : vector<2x128xi32> to vector<1x128xi32>
    %49 = vector.broadcast %48 : vector<1x128xi32> to vector<64x128xi32>
    %50 = arith.cmpi eq, %41, %49 : vector<64x128xi32>
    %51 = arith.extui %50 : vector<64x128xi1> to vector<64x128xi32>
    %52 = arith.sitofp %51 : vector<64x128xi32> to vector<64x128xf32>
    %53 = arith.truncf %52 : vector<64x128xf32> to vector<64x128xbf16>
    %cst_12 = arith.constant dense<0.000000e+00> : vector<64x64xf32>
    %54 = tpu.matmul %53, %47, %cst_12 {dimension_numbers = #tpu.dot_dimension_numbers<[1], [1], [0], [0], [0, 0, 1, 0], [], []>} : vector<64x128xbf16>, vector<64x128xbf16>, vector<64x64xf32> -> vector<64x64xf32>
    %c0_13 = arith.constant 0 : index
    %c0_14 = arith.constant 0 : index
    %55 = vector.load %arg3[%c0_13, %c0_14] : memref<128x32xf32, #tpu.memory_space<vmem>>, vector<32x32xf32>
    %c32 = arith.constant 32 : index
    %c0_15 = arith.constant 0 : index
    %56 = vector.load %arg3[%c32, %c0_15] : memref<128x32xf32, #tpu.memory_space<vmem>>, vector<32x32xf32>
    %57 = vector.extract_strided_slice %0 {offsets = [2, 0], sizes = [1, 32], strides = [1, 1]} : vector<8x32xf32> to vector<1x32xf32>
    %58 = vector.extract_strided_slice %0 {offsets = [3, 0], sizes = [1, 32], strides = [1, 1]} : vector<8x32xf32> to vector<1x32xf32>
    %59 = vector.extract_strided_slice %0 {offsets = [4, 0], sizes = [1, 32], strides = [1, 1]} : vector<8x32xf32> to vector<1x32xf32>
    %cst_16 = arith.constant dense<0.000000e+00> : vector<64x32xf32>
    %60 = tpu.matmul %54, %39, %cst_16 {dimension_numbers = #tpu.dot_dimension_numbers<[1], [0], [0], [1], [0, 0, 1, 1], [], []>} : vector<64x64xf32>, vector<64x32xf32>, vector<64x32xf32> -> vector<64x32xf32>
    %cst_17 = arith.constant dense<0.000000e+00> : vector<64x32xf32>
    %61 = tpu.matmul %60, %55, %cst_17 {dimension_numbers = #tpu.dot_dimension_numbers<[1], [0], [0], [1], [0, 0, 1, 1], [], []>} : vector<64x32xf32>, vector<32x32xf32>, vector<64x32xf32> -> vector<64x32xf32>
    %cst_18 = arith.constant dense<0.000000e+00> : vector<64x32xf32>
    %62 = tpu.matmul %39, %56, %cst_18 {dimension_numbers = #tpu.dot_dimension_numbers<[1], [0], [0], [1], [0, 0, 1, 1], [], []>} : vector<64x32xf32>, vector<32x32xf32>, vector<64x32xf32> -> vector<64x32xf32>
    %63 = arith.addf %61, %62 : vector<64x32xf32>
    %64 = vector.broadcast %57 : vector<1x32xf32> to vector<64x32xf32>
    %65 = arith.addf %63, %64 : vector<64x32xf32>
    %cst_19 = arith.constant 0.000000e+00 : f32
    %66 = vector.broadcast %cst_19 : f32 to vector<64x32xf32>
    %67 = arith.maximumf %65, %66 : vector<64x32xf32>
    %68 = arith.addf %67, %39 : vector<64x32xf32>
    %cst_20 = arith.constant dense<0.000000e+00> : vector<64xf32>
    %69 = vector.multi_reduction <add>, %68, %cst_20 [1] : vector<64x32xf32> to vector<64xf32>
    %70 = vector.shape_cast %69 : vector<64xf32> to vector<64x1xf32>
    %cst_21 = arith.constant 3.200000e+01 : f32
    %71 = vector.broadcast %cst_21 : f32 to vector<64x1xf32>
    %72 = arith.divf %70, %71 : vector<64x1xf32>
    %73 = vector.broadcast %72 : vector<64x1xf32> to vector<64x32xf32>
    %74 = arith.subf %68, %73 : vector<64x32xf32>
    %75 = arith.mulf %74, %74 : vector<64x32xf32>
    %cst_22 = arith.constant dense<0.000000e+00> : vector<64xf32>
    %76 = vector.multi_reduction <add>, %75, %cst_22 [1] : vector<64x32xf32> to vector<64xf32>
    %77 = vector.shape_cast %76 : vector<64xf32> to vector<64x1xf32>
    %cst_23 = arith.constant 3.200000e+01 : f32
    %78 = vector.broadcast %cst_23 : f32 to vector<64x1xf32>
    %79 = arith.divf %77, %78 : vector<64x1xf32>
    %80 = vector.broadcast %72 : vector<64x1xf32> to vector<64x32xf32>
    %81 = arith.subf %68, %80 : vector<64x32xf32>
    %cst_24 = arith.constant 9.99999974E-6 : f32
    %82 = vector.broadcast %cst_24 : f32 to vector<64x1xf32>
    %83 = arith.addf %79, %82 : vector<64x1xf32>
    %84 = math.rsqrt %83 : vector<64x1xf32>
    %85 = vector.broadcast %84 : vector<64x1xf32> to vector<64x32xf32>
    %86 = arith.mulf %81, %85 : vector<64x32xf32>
    %87 = vector.broadcast %58 : vector<1x32xf32> to vector<64x32xf32>
    %88 = arith.mulf %86, %87 : vector<64x32xf32>
    %89 = vector.broadcast %59 : vector<1x32xf32> to vector<64x32xf32>
    %90 = arith.addf %88, %89 : vector<64x32xf32>
    %c64 = arith.constant 64 : index
    %c0_25 = arith.constant 0 : index
    %91 = vector.load %arg3[%c64, %c0_25] : memref<128x32xf32, #tpu.memory_space<vmem>>, vector<32x32xf32>
    %c96 = arith.constant 96 : index
    %c0_26 = arith.constant 0 : index
    %92 = vector.load %arg3[%c96, %c0_26] : memref<128x32xf32, #tpu.memory_space<vmem>>, vector<32x32xf32>
    %93 = vector.extract_strided_slice %0 {offsets = [5, 0], sizes = [1, 32], strides = [1, 1]} : vector<8x32xf32> to vector<1x32xf32>
    %94 = vector.extract_strided_slice %0 {offsets = [6, 0], sizes = [1, 32], strides = [1, 1]} : vector<8x32xf32> to vector<1x32xf32>
    %95 = vector.extract_strided_slice %0 {offsets = [7, 0], sizes = [1, 32], strides = [1, 1]} : vector<8x32xf32> to vector<1x32xf32>
    %cst_27 = arith.constant dense<0.000000e+00> : vector<64x32xf32>
    %96 = tpu.matmul %54, %90, %cst_27 {dimension_numbers = #tpu.dot_dimension_numbers<[1], [0], [0], [1], [0, 0, 1, 1], [], []>} : vector<64x64xf32>, vector<64x32xf32>, vector<64x32xf32> -> vector<64x32xf32>
    %cst_28 = arith.constant dense<0.000000e+00> : vector<64x32xf32>
    %97 = tpu.matmul %96, %91, %cst_28 {dimension_numbers = #tpu.dot_dimension_numbers<[1], [0], [0], [1], [0, 0, 1, 1], [], []>} : vector<64x32xf32>, vector<32x32xf32>, vector<64x32xf32> -> vector<64x32xf32>
    %cst_29 = arith.constant dense<0.000000e+00> : vector<64x32xf32>
    %98 = tpu.matmul %90, %92, %cst_29 {dimension_numbers = #tpu.dot_dimension_numbers<[1], [0], [0], [1], [0, 0, 1, 1], [], []>} : vector<64x32xf32>, vector<32x32xf32>, vector<64x32xf32> -> vector<64x32xf32>
    %99 = arith.addf %97, %98 : vector<64x32xf32>
    %100 = vector.broadcast %93 : vector<1x32xf32> to vector<64x32xf32>
    %101 = arith.addf %99, %100 : vector<64x32xf32>
    %cst_30 = arith.constant 0.000000e+00 : f32
    %102 = vector.broadcast %cst_30 : f32 to vector<64x32xf32>
    %103 = arith.maximumf %101, %102 : vector<64x32xf32>
    %104 = arith.addf %103, %90 : vector<64x32xf32>
    %cst_31 = arith.constant dense<0.000000e+00> : vector<64xf32>
    %105 = vector.multi_reduction <add>, %104, %cst_31 [1] : vector<64x32xf32> to vector<64xf32>
    %106 = vector.shape_cast %105 : vector<64xf32> to vector<64x1xf32>
    %cst_32 = arith.constant 3.200000e+01 : f32
    %107 = vector.broadcast %cst_32 : f32 to vector<64x1xf32>
    %108 = arith.divf %106, %107 : vector<64x1xf32>
    %109 = vector.broadcast %108 : vector<64x1xf32> to vector<64x32xf32>
    %110 = arith.subf %104, %109 : vector<64x32xf32>
    %111 = arith.mulf %110, %110 : vector<64x32xf32>
    %cst_33 = arith.constant dense<0.000000e+00> : vector<64xf32>
    %112 = vector.multi_reduction <add>, %111, %cst_33 [1] : vector<64x32xf32> to vector<64xf32>
    %113 = vector.shape_cast %112 : vector<64xf32> to vector<64x1xf32>
    %cst_34 = arith.constant 3.200000e+01 : f32
    %114 = vector.broadcast %cst_34 : f32 to vector<64x1xf32>
    %115 = arith.divf %113, %114 : vector<64x1xf32>
    %116 = vector.broadcast %108 : vector<64x1xf32> to vector<64x32xf32>
    %117 = arith.subf %104, %116 : vector<64x32xf32>
    %cst_35 = arith.constant 9.99999974E-6 : f32
    %118 = vector.broadcast %cst_35 : f32 to vector<64x1xf32>
    %119 = arith.addf %115, %118 : vector<64x1xf32>
    %120 = math.rsqrt %119 : vector<64x1xf32>
    %121 = vector.broadcast %120 : vector<64x1xf32> to vector<64x32xf32>
    %122 = arith.mulf %117, %121 : vector<64x32xf32>
    %123 = vector.broadcast %94 : vector<1x32xf32> to vector<64x32xf32>
    %124 = arith.mulf %122, %123 : vector<64x32xf32>
    %125 = vector.broadcast %95 : vector<1x32xf32> to vector<64x32xf32>
    %126 = arith.addf %124, %125 : vector<64x32xf32>
    %c0_36 = arith.constant 0 : index
    %c0_37 = arith.constant 0 : index
    %127 = vector.load %arg5[%c0_36, %c0_37] : memref<64x32xf32, #tpu.memory_space<vmem>>, vector<64x32xf32>
    tpu.vector_store %arg5[%c0_36, %c0_37], %126 {strides = array<i32>} : memref<64x32xf32, #tpu.memory_space<vmem>>, vector<64x32xf32>,
    return
  }
}

</mosaic_0001>

<llo_original>
// kernel: ast_enc_forward.1
$region0: #{ast_enc_forward.1}
  #allocation0 [shape = 'u32[]', space=smem, size = 0x4, offset = 0x4, fixed_abs, tag = 'smem constant byte address 0x4 - core index']
  #allocation1 [shape = 'u32[144,128]{1,0:T(1,128)}', space=vmem, size = 0x12000, scoped, tag = 'internal scratch']
  %s0 = inlined_call_operand.vmem [shape: s32[2,128], index: 0, kind: input, shape index: {}]
  %s1 = inlined_call_operand.vmem [shape: s32[64,2], index: 1, kind: input, shape index: {}]
  %s2 = inlined_call_operand.vmem [shape: f32[128,32], index: 2, kind: input, shape index: {}]
  %s3 = inlined_call_operand.vmem [shape: f32[128,32], index: 3, kind: input, shape index: {}]
  %s4 = inlined_call_operand.vmem [shape: f32[8,32], index: 4, kind: input, shape index: {}]
  %s5 = inlined_call_operand.vmem [shape: f32[64,32], index: 5, kind: output, shape index: {}]
  %s6 = sld [smem:[#allocation0]]
  $region30: #{ast_enc_forward.1} parent=0
    _
  %s8 = ssub.s32 1, %s6
  %s9 = scalar_select 0, %s8, %s6
  // Predicated region
  $region2: #{ast_enc_forward.1} parent=0 // pred_check
    _
  $region3: #{ast_enc_forward.1} parent=0 // pred_check_branch
    %11 = sbr.rel (0) target = $region5
  $region4: #{ast_enc_forward.1} parent=0 // pred_region
    _
  $region5: #{ast_enc_forward.1} parent=0 // pred_fallthru
    _
  // Predicated region
  $region6: #{ast_enc_forward.1} parent=0 // pred_check
    _
  $region7: #{ast_enc_forward.1} parent=0 // pred_check_branch
    %13 = sbr.rel (0) target = $region9
  $region8: #{ast_enc_forward.1} parent=0 // pred_region
    _
  $region9: #{ast_enc_forward.1} parent=0 // pred_fallthru
    _
  // Predicated region
  $region10: #{ast_enc_forward.1} parent=0 // pred_check
    _
  $region11: #{ast_enc_forward.1} parent=0 // pred_check_branch
    %15 = sbr.rel (0) target = $region13
  $region12: #{ast_enc_forward.1} parent=0 // pred_region
    _
  $region13: #{ast_enc_forward.1} parent=0 // pred_fallthru
    _
  // Predicated region
  $region14: #{ast_enc_forward.1} parent=0 // pred_check
    _
  $region15: #{ast_enc_forward.1} parent=0 // pred_check_branch
    %17 = sbr.rel (0) target = $region17
  $region16: #{ast_enc_forward.1} parent=0 // pred_region
    _
  $region17: #{ast_enc_forward.1} parent=0 // pred_fallthru
    _
  // Predicated region
  $region18: #{ast_enc_forward.1} parent=0 // pred_check
    _
  $region19: #{ast_enc_forward.1} parent=0 // pred_check_branch
    %19 = sbr.rel (0) target = $region21
  $region20: #{ast_enc_forward.1} parent=0 // pred_region
    _
  $region21: #{ast_enc_forward.1} parent=0 // pred_fallthru
    _
  %v21 = vld [vmem:[%s4] sm:$0xff]
  %v22 = vld [vmem:[%s1] sm:$0xff]
  %v23 = vld [vmem:[%s1 + $0x8] sm:$0xff]
  %v24 = vld [vmem:[%s1 + $0x10] sm:$0xff]
  %v25 = vld [vmem:[%s1 + $0x18] sm:$0xff]
  %v26 = vld [vmem:[%s1 + $0x20] sm:$0xff]
  %v27 = vld [vmem:[%s1 + $0x28] sm:$0xff]
  %v28 = vld [vmem:[%s1 + $0x30] sm:$0xff]
  %v29 = vld [vmem:[%s1 + $0x38] sm:$0xff]
  %v30 = vadd.s32 %v22, 64
  %v31 = vadd.s32 %v23, 64
  %v32 = vadd.s32 %v24, 64
  %v33 = vadd.s32 %v25, 64
  %v34 = vadd.s32 %v26, 64
  %v35 = vadd.s32 %v27, 64
  %v36 = vadd.s32 %v28, 64
  %v37 = vadd.s32 %v29, 64
  %v38 = vlaneseq
  %v39 = vand.u32 %v38, 127
  %40 = vset.pattern.permute.xlu0 0
  %41 = vperm.xlu0 %40, %v22
  %v42 = vpop.permute.xlu0 %41
  %43 = vset.pattern.permute.xlu0 0
  %44 = vperm.xlu0 %43, %v23
  %v45 = vpop.permute.xlu0 %44
  %46 = vset.pattern.permute.xlu0 0
  %47 = vperm.xlu0 %46, %v24
  %v48 = vpop.permute.xlu0 %47
  %49 = vset.pattern.permute.xlu0 0
  %50 = vperm.xlu0 %49, %v25
  %v51 = vpop.permute.xlu0 %50
  %52 = vset.pattern.permute.xlu0 0
  %53 = vperm.xlu0 %52, %v26
  %v54 = vpop.permute.xlu0 %53
  %55 = vset.pattern.permute.xlu0 0
  %56 = vperm.xlu0 %55, %v27
  %v57 = vpop.permute.xlu0 %56
  %58 = vset.pattern.permute.xlu0 0
  %59 = vperm.xlu0 %58, %v28
  %v60 = vpop.permute.xlu0 %59
  %61 = vset.pattern.permute.xlu0 0
  %62 = vperm.xlu0 %61, %v29
  %v63 = vpop.permute.xlu0 %62
  %vm64 = vcmp.eq.s32.totalorder %v39, %v42
  %vm65 = vcmp.eq.s32.totalorder %v39, %v45
  %vm66 = vcmp.eq.s32.totalorder %v39, %v48
  %vm67 = vcmp.eq.s32.totalorder %v39, %v51
  %vm68 = vcmp.eq.s32.totalorder %v39, %v54
  %vm69 = vcmp.eq.s32.totalorder %v39, %v57
  %vm70 = vcmp.eq.s32.totalorder %v39, %v60
  %vm71 = vcmp.eq.s32.totalorder %v39, %v63
  %72 = vset.pattern.permute.xlu0 1
  %73 = vperm.xlu0 %72, %v30
  %v74 = vpop.permute.xlu0 %73
  %75 = vset.pattern.permute.xlu0 1
  %76 = vperm.xlu0 %75, %v31
  %v77 = vpop.permute.xlu0 %76
  %78 = vset.pattern.permute.xlu0 1
  %79 = vperm.xlu0 %78, %v32
  %v80 = vpop.permute.xlu0 %79
  %81 = vset.pattern.permute.xlu0 1
  %82 = vperm.xlu0 %81, %v33
  %v83 = vpop.permute.xlu0 %82
  %84 = vset.pattern.permute.xlu0 1
  %85 = vperm.xlu0 %84, %v34
  %v86 = vpop.permute.xlu0 %85
  %87 = vset.pattern.permute.xlu0 1
  %88 = vperm.xlu0 %87, %v35
  %v89 = vpop.permute.xlu0 %88
  %90 = vset.pattern.permute.xlu0 1
  %91 = vperm.xlu0 %90, %v36
  %v92 = vpop.permute.xlu0 %91
  %93 = vset.pattern.permute.xlu0 1
  %94 = vperm.xlu0 %93, %v37
  %v95 = vpop.permute.xlu0 %94
  %vm96 = vcmp.eq.s32.totalorder %v39, %v74
  %vm97 = vcmp.eq.s32.totalorder %v39, %v77
  %vm98 = vcmp.eq.s32.totalorder %v39, %v80
  %vm99 = vcmp.eq.s32.totalorder %v39, %v83
  %vm100 = vcmp.eq.s32.totalorder %v39, %v86
  %vm101 = vcmp.eq.s32.totalorder %v39, %v89
  %vm102 = vcmp.eq.s32.totalorder %v39, %v92
  %vm103 = vcmp.eq.s32.totalorder %v39, %v95
  %vm104 = vmor %vm64, %vm96
  %vm105 = vmor %vm65, %vm97
  %vm106 = vmor %vm66, %vm98
  %vm107 = vmor %vm67, %vm99
  %vm108 = vmor %vm68, %vm100
  %vm109 = vmor %vm69, %vm101
  %vm110 = vmor %vm70, %vm102
  %vm111 = vmor %vm71, %vm103
  %v112 = vsel %vm104, 1, 0
  %v113 = vsel %vm105, 1, 0
  %v114 = vsel %vm106, 1, 0
  %v115 = vsel %vm107, 1, 0
  %v116 = vsel %vm108, 1, 0
  %v117 = vsel %vm109, 1, 0
  %v118 = vsel %vm110, 1, 0
  %v119 = vsel %vm111, 1, 0
  %v120 = vcvt.s32.f32 %v112
  %v121 = vcvt.s32.f32 %v113
  %v122 = vcvt.s32.f32 %v114
  %v123 = vcvt.s32.f32 %v115
  %v124 = vcvt.s32.f32 %v116
  %v125 = vcvt.s32.f32 %v117
  %v126 = vcvt.s32.f32 %v118
  %v127 = vcvt.s32.f32 %v119
  %v128 = vld [vmem:[%s2] sm:$0xff]
  %v129 = vld [vmem:[%s2 + $0x8] sm:$0xff]
  %v130 = vld [vmem:[%s2 + $0x10] sm:$0xff]
  %v131 = vld [vmem:[%s2 + $0x18] sm:$0xff]
  %v132 = vld [vmem:[%s2 + $0x20] sm:$0xff]
  %v133 = vld [vmem:[%s2 + $0x28] sm:$0xff]
  %v134 = vld [vmem:[%s2 + $0x30] sm:$0xff]
  %v135 = vld [vmem:[%s2 + $0x38] sm:$0xff]
  %v136 = vld [vmem:[%s2 + $0x40] sm:$0xff]
  %v137 = vld [vmem:[%s2 + $0x48] sm:$0xff]
  %v138 = vld [vmem:[%s2 + $0x50] sm:$0xff]
  %v139 = vld [vmem:[%s2 + $0x58] sm:$0xff]
  %v140 = vld [vmem:[%s2 + $0x60] sm:$0xff]
  %v141 = vld [vmem:[%s2 + $0x68] sm:$0xff]
  %v142 = vld [vmem:[%s2 + $0x70] sm:$0xff]
  %v143 = vld [vmem:[%s2 + $0x78] sm:$0xff]
  %144 = vmatprep.subr.mxu0 0.0
  %145 = vmatpush1.msra.mxu0 %v128
  %146 = vmatprep.subr.mxu0 0.0
  %147 = vmatpush1.msra.mxu0 %v129
  %148 = vmatprep.subr.mxu0 0.0
  %149 = vmatpush1.msra.mxu0 %v130
  %150 = vmatprep.subr.mxu0 0.0
  %151 = vmatpush1.msra.mxu0 %v131
  %152 = vmatprep.subr.mxu0 0.0
  %153 = vmatpush1.msra.mxu0 %v132
  %154 = vmatprep.subr.mxu0 0.0
  %155 = vmatpush1.msra.mxu0 %v133
  %156 = vmatprep.subr.mxu0 0.0
  %157 = vmatpush1.msra.mxu0 %v134
  %158 = vmatprep.subr.mxu0 0.0
  %159 = vmatpush1.msra.mxu0 %v135
  %160 = vmatprep.subr.mxu0 0.0
  %161 = vmatpush1.msra.mxu0 %v136
  %162 = vmatprep.subr.mxu0 0.0
  %163 = vmatpush1.msra.mxu0 %v137
  %164 = vmatprep.subr.mxu0 0.0
  %165 = vmatpush1.msra.mxu0 %v138
  %166 = vmatprep.subr.mxu0 0.0
  %167 = vmatpush1.msra.mxu0 %v139
  %168 = vmatprep.subr.mxu0 0.0
  %169 = vmatpush1.msra.mxu0 %v140
  %170 = vmatprep.subr.mxu0 0.0
  %171 = vmatpush1.msra.mxu0 %v141
  %172 = vmatprep.subr.mxu0 0.0
  %173 = vmatpush1.msra.mxu0 %v142
  %174 = vmatprep.subr.mxu0 0.0
  %175 = vmatpush1.msra.mxu0 %v143
  %176 = vmatprep.subr.mxu0 0.0
  %177 = vmatpush1.msra.mxu0 0.0
  %178 = vmatprep.subr.mxu0 0.0
  %179 = vmatpush1.msra.mxu0 0.0
  %180 = vmatprep.subr.mxu0 0.0
  %181 = vmatpush1.msra.mxu0 0.0
  %182 = vmatprep.subr.mxu0 0.0
  %183 = vmatpush1.msra.mxu0 0.0
  %184 = vmatprep.subr.mxu0 0.0
  %185 = vmatpush1.msra.mxu0 0.0
  %186 = vmatprep.subr.mxu0 0.0
  %187 = vmatpush1.msra.mxu0 0.0
  %188 = vmatprep.subr.mxu0 0.0
  %189 = vmatpush1.msra.mxu0 0.0
  %190 = vmatprep.subr.mxu0 0.0
  %191 = vmatpush1.msra.mxu0 0.0
  %192 = vmatprep.subr.mxu0 0.0
  %193 = vmatpush1.msra.mxu0 0.0
  %194 = vmatprep.subr.mxu0 0.0
  %195 = vmatpush1.msra.mxu0 0.0
  %196 = vmatprep.subr.mxu0 0.0
  %197 = vmatpush1.msra.mxu0 0.0
  %198 = vmatprep.subr.mxu0 0.0
  %199 = vmatpush1.msra.mxu0 0.0
  %200 = vmatprep.subr.mxu0 0.0
  %201 = vmatpush1.msra.mxu0 0.0
  %202 = vmatprep.subr.mxu0 0.0
  %203 = vmatpush1.msra.mxu0 0.0
  %204 = vmatprep.subr.mxu0 0.0
  %205 = vmatpush1.msra.mxu0 0.0
  %206 = vmatprep.subr.mxu0 0.0
  %207 = vmatpush1.msra.mxu0 0.0
  %208 = vmatprep.mubr.f32.mxu0 0.0
  %209 = vmatmul.mubr.f32.gmra.mrb[0].mxu0 %v120
  %v210 = vpop.f32.mrb[0].mxu0
  %v211 = vadd.f32 0.0, %v210
  %v212 = vpop.f32.mrb[0].mxu0
  %213 = vmatprep.mubr.f32.mxu0 0.0
  %214 = vmatmul.mubr.f32.gmra.mrb[0].mxu0 %v121
  %v215 = vpop.f32.mrb[0].mxu0
  %v216 = vadd.f32 0.0, %v215
  %v217 = vpop.f32.mrb[0].mxu0
  %218 = vmatprep.mubr.f32.mxu0 0.0
  %219 = vmatmul.mubr.f32.gmra.mrb[0].mxu0 %v122
  %v220 = vpop.f32.mrb[0].mxu0
  %v221 = vadd.f32 0.0, %v220
  %v222 = vpop.f32.mrb[0].mxu0
  %223 = vmatprep.mubr.f32.mxu0 0.0
  %224 = vmatmul.mubr.f32.gmra.mrb[0].mxu0 %v123
  %v225 = vpop.f32.mrb[0].mxu0
  %v226 = vadd.f32 0.0, %v225
  %v227 = vpop.f32.mrb[0].mxu0
  %228 = vmatprep.mubr.f32.mxu0 0.0
  %229 = vmatmul.mubr.f32.gmra.mrb[0].mxu0 %v124
  %v230 = vpop.f32.mrb[0].mxu0
  %v231 = vadd.f32 0.0, %v230
  %v232 = vpop.f32.mrb[0].mxu0
  %233 = vmatprep.mubr.f32.mxu0 0.0
  %234 = vmatmul.mubr.f32.gmra.mrb[0].mxu0 %v125
  %v235 = vpop.f32.mrb[0].mxu0
  %v236 = vadd.f32 0.0, %v235
  %v237 = vpop.f32.mrb[0].mxu0
  %238 = vmatprep.mubr.f32.mxu0 0.0
  %239 = vmatmul.mubr.f32.gmra.mrb[0].mxu0 %v126
  %v240 = vpop.f32.mrb[0].mxu0
  %v241 = vadd.f32 0.0, %v240
  %v242 = vpop.f32.mrb[0].mxu0
  %243 = vmatprep.mubr.f32.mxu0 0.0
  %244 = vmatmul.mubr.f32.gmra.mrb[0].mxu0 %v127
  %v245 = vpop.f32.mrb[0].mxu0
  %v246 = vadd.f32 0.0, %v245
  %v247 = vpop.f32.mrb[0].mxu0
  %248 = vdwg.mxu0
  %vm249 = vcmask 261120
  %v250 = vsel %vm249, %v211, 0.0
  %251 = vadd.xlane.f32.xlu0 %v250
  %v252 = vpop.xlane.xlu0 %251
  %v253 = vsel %vm249, %v216, 0.0
  %254 = vadd.xlane.f32.xlu0 %v253
  %v255 = vpop.xlane.xlu0 %254
  %v256 = vsel %vm249, %v221, 0.0
  %257 = vadd.xlane.f32.xlu0 %v256
  %v258 = vpop.xlane.xlu0 %257
  %v259 = vsel %vm249, %v226, 0.0
  %260 = vadd.xlane.f32.xlu0 %v259
  %v261 = vpop.xlane.xlu0 %260
  %v262 = vsel %vm249, %v231, 0.0
  %263 = vadd.xlane.f32.xlu0 %v262
  %v264 = vpop.xlane.xlu0 %263
  %v265 = vsel %vm249, %v236, 0.0
  %266 = vadd.xlane.f32.xlu0 %v265
  %v267 = vpop.xlane.xlu0 %266
  %v268 = vsel %vm249, %v241, 0.0
  %269 = vadd.xlane.f32.xlu0 %v268
  %v270 = vpop.xlane.xlu0 %269
  %v271 = vsel %vm249, %v246, 0.0
  %272 = vadd.xlane.f32.xlu0 %v271
  %v273 = vpop.xlane.xlu0 %272
  %v274 = vrcp.pop 32.0
  %v275 = vmul.f32 %v252, %v274
  %v276 = vmul.f32 %v255, %v274
  %v277 = vmul.f32 %v258, %v274
  %v278 = vmul.f32 %v261, %v274
  %v279 = vmul.f32 %v264, %v274
  %v280 = vmul.f32 %v267, %v274
  %v281 = vmul.f32 %v270, %v274
  %v282 = vmul.f32 %v273, %v274
  %v283 = vsub.f32 %v211, %v275
  %v284 = vsub.f32 %v216, %v276
  %v285 = vsub.f32 %v221, %v277
  %v286 = vsub.f32 %v226, %v278
  %v287 = vsub.f32 %v231, %v279
  %v288 = vsub.f32 %v236, %v280
  %v289 = vsub.f32 %v241, %v281
  %v290 = vsub.f32 %v246, %v282
  %v291 = vmul.f32 %v283, %v283
  %v292 = vmul.f32 %v284, %v284
  %v293 = vmul.f32 %v285, %v285
  %v294 = vmul.f32 %v286, %v286
  %v295 = vmul.f32 %v287, %v287
  %v296 = vmul.f32 %v288, %v288
  %v297 = vmul.f32 %v289, %v289
  %v298 = vmul.f32 %v290, %v290
  %v299 = vsel %vm249, %v291, 0.0
  %300 = vadd.xlane.f32.xlu0 %v299
  %v301 = vpop.xlane.xlu0 %300
  %v302 = vsel %vm249, %v292, 0.0
  %303 = vadd.xlane.f32.xlu0 %v302
  %v304 = vpop.xlane.xlu0 %303
  %v305 = vsel %vm249, %v293, 0.0
  %306 = vadd.xlane.f32.xlu0 %v305
  %v307 = vpop.xlane.xlu0 %306
  %v308 = vsel %vm249, %v294, 0.0
  %309 = vadd.xlane.f32.xlu0 %v308
  %v310 = vpop.xlane.xlu0 %309
  %v311 = vsel %vm249, %v295, 0.0
  %312 = vadd.xlane.f32.xlu0 %v311
  %v313 = vpop.xlane.xlu0 %312
  %v314 = vsel %vm249, %v296, 0.0
  %315 = vadd.xlane.f32.xlu0 %v314
  %v316 = vpop.xlane.xlu0 %315
  %v317 = vsel %vm249, %v297, 0.0
  %318 = vadd.xlane.f32.xlu0 %v317
  %v319 = vpop.xlane.xlu0 %318
  %v320 = vsel %vm249, %v298, 0.0
  %321 = vadd.xlane.f32.xlu0 %v320
  %v322 = vpop.xlane.xlu0 %321
  %v323 = vmul.f32 %v301, %v274
  %v324 = vmul.f32 %v304, %v274
  %v325 = vmul.f32 %v307, %v274
  %v326 = vmul.f32 %v310, %v274
  %v327 = vmul.f32 %v313, %v274
  %v328 = vmul.f32 %v316, %v274
  %v329 = vmul.f32 %v319, %v274
  %v330 = vmul.f32 %v322, %v274
  %v331 = vadd.f32 %v323, 1e-05
  %v332 = vadd.f32 %v324, 1e-05
  %v333 = vadd.f32 %v325, 1e-05
  %v334 = vadd.f32 %v326, 1e-05
  %v335 = vadd.f32 %v327, 1e-05
  %v336 = vadd.f32 %v328, 1e-05
  %v337 = vadd.f32 %v329, 1e-05
  %v338 = vadd.f32 %v330, 1e-05
  %v339 = vrsqrt.pop %v331
  %v340 = vrsqrt.pop %v332
  %v341 = vrsqrt.pop %v333
  %v342 = vrsqrt.pop %v334
  %v343 = vrsqrt.pop %v335
  %v344 = vrsqrt.pop %v336
  %v345 = vrsqrt.pop %v337
  %v346 = vrsqrt.pop %v338
  %v347 = vmul.f32 %v283, %v339
  %v348 = vmul.f32 %v284, %v340
  %v349 = vmul.f32 %v285, %v341
  %v350 = vmul.f32 %v286, %v342
  %v351 = vmul.f32 %v287, %v343
  %v352 = vmul.f32 %v288, %v344
  %v353 = vmul.f32 %v289, %v345
  %v354 = vmul.f32 %v290, %v346
  %v355 = vlaneseq
  %v356 = vshrl.u32 %v355, 7
  %v357 = vsub.s32 0, %v356
  %v358 = vrot.slane %v21, %v357
  %v359 = vmul.f32 %v347, %v358
  %v360 = vmul.f32 %v348, %v358
  %v361 = vmul.f32 %v349, %v358
  %v362 = vmul.f32 %v350, %v358
  %v363 = vmul.f32 %v351, %v358
  %v364 = vmul.f32 %v352, %v358
  %v365 = vmul.f32 %v353, %v358
  %v366 = vmul.f32 %v354, %v358
  %v367 = vlaneseq
  %v368 = vshrl.u32 %v367, 7
  %v369 = vsub.s32 1, %v368
  %v370 = vrot.slane %v21, %v369
  %v371 = vadd.f32 %v359, %v370
  %v372 = vadd.f32 %v360, %v370
  %v373 = vadd.f32 %v361, %v370
  %v374 = vadd.f32 %v362, %v370
  %v375 = vadd.f32 %v363, %v370
  %v376 = vadd.f32 %v364, %v370
  %v377 = vadd.f32 %v365, %v370
  %v378 = vadd.f32 %v366, %v370
  %v379 = vld [vmem:[%s0] sm:$0x3]
  %v380 = vlaneseq
  %v381 = vshrl.u32 %v380, 7
  %v382 = vadd.s32 %v381, 8
  %v383 = vadd.s32 %v381, 16
  %v384 = vadd.s32 %v381, 24
  %v385 = vadd.s32 %v381, 32
  %v386 = vadd.s32 %v381, 40
  %v387 = vadd.s32 %v381, 48
  %v388 = vadd.s32 %v381, 56
  %v389 = vlaneseq
  %v390 = vshrl.u32 %v389, 7
  %v391 = vsub.s32 0, %v390
  %v392 = vrot.slane %v379, %v391
  %vm393 = vcmp.eq.s32.totalorder %v381, %v392
  %vm394 = vcmp.eq.s32.totalorder %v382, %v392
  %vm395 = vcmp.eq.s32.totalorder %v383, %v392
  %vm396 = vcmp.eq.s32.totalorder %v384, %v392
  %vm397 = vcmp.eq.s32.totalorder %v385, %v392
  %vm398 = vcmp.eq.s32.totalorder %v386, %v392
  %vm399 = vcmp.eq.s32.totalorder %v387, %v392
  %vm400 = vcmp.eq.s32.totalorder %v388, %v392
  %v401 = vsel %vm393, 1, 0
  %v402 = vsel %vm394, 1, 0
  %v403 = vsel %vm395, 1, 0
  %v404 = vsel %vm396, 1, 0
  %v405 = vsel %vm397, 1, 0
  %v406 = vsel %vm398, 1, 0
  %v407 = vsel %vm399, 1, 0
  %v408 = vsel %vm400, 1, 0
  %v409 = vcvt.s32.f32 %v401
  %v410 = vcvt.s32.f32 %v402
  %v411 = vcvt.s32.f32 %v403
  %v412 = vcvt.s32.f32 %v404
  %v413 = vcvt.s32.f32 %v405
  %v414 = vcvt.s32.f32 %v406
  %v415 = vcvt.s32.f32 %v407
  %v416 = vcvt.s32.f32 %v408
  %v417 = vpack.c.bf16 %v410, %v409
  %v418 = vpack.c.bf16 %v412, %v411
  %v419 = vpack.c.bf16 %v414, %v413
  %v420 = vpack.c.bf16 %v416, %v415
  %v421 = vlaneseq
  %v422 = vshrl.u32 %v421, 7
  %v423 = vsub.s32 1, %v422
  %v424 = vrot.slane %v379, %v423
  %vm425 = vcmp.eq.s32.totalorder %v381, %v424
  %vm426 = vcmp.eq.s32.totalorder %v382, %v424
  %vm427 = vcmp.eq.s32.totalorder %v383, %v424
  %vm428 = vcmp.eq.s32.totalorder %v384, %v424
  %vm429 = vcmp.eq.s32.totalorder %v385, %v424
  %vm430 = vcmp.eq.s32.totalorder %v386, %v424
  %vm431 = vcmp.eq.s32.totalorder %v387, %v424
  %vm432 = vcmp.eq.s32.totalorder %v388, %v424
  %v433 = vsel %vm425, 1, 0
  %v434 = vsel %vm426, 1, 0
  %v435 = vsel %vm427, 1, 0
  %v436 = vsel %vm428, 1, 0
  %v437 = vsel %vm429, 1, 0
  %v438 = vsel %vm430, 1, 0
  %v439 = vsel %vm431, 1, 0
  %v440 = vsel %vm432, 1, 0
  %v441 = vcvt.s32.f32 %v433
  %v442 = vcvt.s32.f32 %v434
  %v443 = vcvt.s32.f32 %v435
  %v444 = vcvt.s32.f32 %v436
  %v445 = vcvt.s32.f32 %v437
  %v446 = vcvt.s32.f32 %v438
  %v447 = vcvt.s32.f32 %v439
  %v448 = vcvt.s32.f32 %v440
  %v449 = vpack.c.bf16 %v442, %v441
  %v450 = vpack.c.bf16 %v444, %v443
  %v451 = vpack.c.bf16 %v446, %v445
  %v452 = vpack.c.bf16 %v448, %v447
  %453 = vmatprep.subr.bf16.mxu0 0
  %454 = vmatpush1.bf16.xpose.msra.mxu0 %v417
  %455 = vmatprep.subr.bf16.mxu0 0
  %456 = vmatpush1.bf16.xpose.msra.mxu0 %v418
  %457 = vmatprep.subr.bf16.mxu0 0
  %458 = vmatpush1.bf16.xpose.msra.mxu0 %v419
  %459 = vmatprep.subr.bf16.mxu0 0
  %460 = vmatpush1.bf16.xpose.msra.mxu0 %v420
  %461 = vmatprep.subr.bf16.mxu0 0
  %462 = vmatpush1.bf16.xpose.msra.mxu0 0
  %463 = vmatprep.subr.bf16.mxu0 0
  %464 = vmatpush1.bf16.xpose.msra.mxu0 0
  %465 = vmatprep.subr.bf16.mxu0 0
  %466 = vmatpush1.bf16.xpose.msra.mxu0 0
  %467 = vmatprep.subr.bf16.mxu0 0
  %468 = vmatpush1.bf16.xpose.msra.mxu0 0
  %469 = vmatprep.subr.bf16.mxu0 0
  %470 = vmatpush1.bf16.xpose.msra.mxu0 0
  %471 = vmatprep.subr.bf16.mxu0 0
  %472 = vmatpush1.bf16.xpose.msra.mxu0 0
  %473 = vmatprep.subr.bf16.mxu0 0
  %474 = vmatpush1.bf16.xpose.msra.mxu0 0
  %475 = vmatprep.subr.bf16.mxu0 0
  %476 = vmatpush1.bf16.xpose.msra.mxu0 0
  %477 = vmatprep.subr.bf16.mxu0 0
  %478 = vmatpush1.bf16.xpose.msra.mxu0 0
  %479 = vmatprep.subr.bf16.mxu0 0
  %480 = vmatpush1.bf16.xpose.msra.mxu0 0
  %481 = vmatprep.subr.bf16.mxu0 0
  %482 = vmatpush1.bf16.xpose.msra.mxu0 0
  %483 = vmatprep.subr.bf16.mxu0 0
  %484 = vmatpush1.bf16.xpose.msra.mxu0 0
  %485 = vmatprep.mubr.bf16.mxu0 0
  %486 = vmatmul.mubr.bf16.gmra.mrb[0].mxu0 %v449
  %v487 = vpop.f32.mrb[0].mxu0
  %v488 = vadd.f32 0.0, %v487
  %v489 = vpop.f32.mrb[0].mxu0
  %v490 = vpop.f32.mrb[0].mxu0
  %v491 = vadd.f32 0.0, %v490
  %v492 = vpop.f32.mrb[0].mxu0
  %493 = vmatprep.mubr.bf16.mxu0 0
  %494 = vmatmul.mubr.bf16.gmra.mrb[0].mxu0 %v450
  %v495 = vpop.f32.mrb[0].mxu0
  %v496 = vadd.f32 0.0, %v495
  %v497 = vpop.f32.mrb[0].mxu0
  %v498 = vpop.f32.mrb[0].mxu0
  %v499 = vadd.f32 0.0, %v498
  %v500 = vpop.f32.mrb[0].mxu0
  %501 = vmatprep.mubr.bf16.mxu0 0
  %502 = vmatmul.mubr.bf16.gmra.mrb[0].mxu0 %v451
  %v503 = vpop.f32.mrb[0].mxu0
  %v504 = vadd.f32 0.0, %v503
  %v505 = vpop.f32.mrb[0].mxu0
  %v506 = vpop.f32.mrb[0].mxu0
  %v507 = vadd.f32 0.0, %v506
  %v508 = vpop.f32.mrb[0].mxu0
  %509 = vmatprep.mubr.bf16.mxu0 0
  %510 = vmatmul.mubr.bf16.gmra.mrb[0].mxu0 %v452
  %v511 = vpop.f32.mrb[0].mxu0
  %v512 = vadd.f32 0.0, %v511
  %v513 = vpop.f32.mrb[0].mxu0
  %v514 = vpop.f32.mrb[0].mxu0
  %v515 = vadd.f32 0.0, %v514
  %v516 = vpop.f32.mrb[0].mxu0
  %517 = vdwg.mxu0
  %v518 = vld [vmem:[%s3] sm:$0xff]
  %v519 = vld [vmem:[%s3 + $0x8] sm:$0xff]
  %v520 = vld [vmem:[%s3 + $0x10] sm:$0xff]
  %v521 = vld [vmem:[%s3 + $0x18] sm:$0xff]
  %v522 = vld [vmem:[%s3 + $0x20] sm:$0xff]
  %v523 = vld [vmem:[%s3 + $0x28] sm:$0xff]
  %v524 = vld [vmem:[%s3 + $0x30] sm:$0xff]
  %v525 = vld [vmem:[%s3 + $0x38] sm:$0xff]
  %vm526 = vcmask 523264
  %v528 = vsel %vm526, %v488, 0
  %v531 = vsel %vm526, %v491, 0
  %v534 = vsel %vm526, %v496, 0
  %v537 = vsel %vm526, %v499, 0
  %v540 = vsel %vm526, %v504, 0
  %v543 = vsel %vm526, %v507, 0
  %v546 = vsel %vm526, %v512, 0
  %v549 = vsel %vm526, %v515, 0
  %551 = vmatprep.subr.mxu0 0.0
  %552 = vmatpush1.msra.mxu0 %v371
  %553 = vmatprep.subr.mxu0 0.0
  %554 = vmatpush1.msra.mxu0 %v372
  %555 = vmatprep.subr.mxu0 0.0
  %556 = vmatpush1.msra.mxu0 %v373
  %557 = vmatprep.subr.mxu0 0.0
  %558 = vmatpush1.msra.mxu0 %v374
  %559 = vmatprep.subr.mxu0 0.0
  %560 = vmatpush1.msra.mxu0 %v375
  %561 = vmatprep.subr.mxu0 0.0
  %562 = vmatpush1.msra.mxu0 %v376
  %563 = vmatprep.subr.mxu0 0.0
  %564 = vmatpush1.msra.mxu0 %v377
  %565 = vmatprep.subr.mxu0 0.0
  %566 = vmatpush1.msra.mxu0 %v378
  %567 = vmatprep.subr.mxu0 0.0
  %568 = vmatpush1.msra.mxu0 0.0
  %569 = vmatprep.subr.mxu0 0.0
  %570 = vmatpush1.msra.mxu0 0.0
  %571 = vmatprep.subr.mxu0 0.0
  %572 = vmatpush1.msra.mxu0 0.0
  %573 = vmatprep.subr.mxu0 0.0
  %574 = vmatpush1.msra.mxu0 0.0
  %575 = vmatprep.subr.mxu0 0.0
  %576 = vmatpush1.msra.mxu0 0.0
  %577 = vmatprep.subr.mxu0 0.0
  %578 = vmatpush1.msra.mxu0 0.0
  %579 = vmatprep.subr.mxu0 0.0
  %580 = vmatpush1.msra.mxu0 0.0
  %581 = vmatprep.subr.mxu0 0.0
  %582 = vmatpush1.msra.mxu0 0.0
  %583 = vmatprep.subr.mxu0 0.0
  %584 = vmatpush1.msra.mxu0 0.0
  %585 = vmatprep.subr.mxu0 0.0
  %586 = vmatpush1.msra.mxu0 0.0
  %587 = vmatprep.subr.mxu0 0.0
  %588 = vmatpush1.msra.mxu0 0.0
  %589 = vmatprep.subr.mxu0 0.0
  %590 = vmatpush1.msra.mxu0 0.0
  %591 = vmatprep.subr.mxu0 0.0
  %592 = vmatpush1.msra.mxu0 0.0
  %593 = vmatprep.subr.mxu0 0.0
  %594 = vmatpush1.msra.mxu0 0.0
  %595 = vmatprep.subr.mxu0 0.0
  %596 = vmatpush1.msra.mxu0 0.0
  %597 = vmatprep.subr.mxu0 0.0
  %598 = vmatpush1.msra.mxu0 0.0
  %599 = vmatprep.subr.mxu0 0.0
  %600 = vmatpush1.msra.mxu0 0.0
  %601 = vmatprep.subr.mxu0 0.0
  %602 = vmatpush1.msra.mxu0 0.0
  %603 = vmatprep.subr.mxu0 0.0
  %604 = vmatpush1.msra.mxu0 0.0
  %605 = vmatprep.subr.mxu0 0.0
  %606 = vmatpush1.msra.mxu0 0.0
  %607 = vmatprep.subr.mxu0 0.0
  %608 = vmatpush1.msra.mxu0 0.0
  %609 = vmatprep.subr.mxu0 0.0
  %610 = vmatpush1.msra.mxu0 0.0
  %611 = vmatprep.subr.mxu0 0.0
  %612 = vmatpush1.msra.mxu0 0.0
  %613 = vmatprep.subr.mxu0 0.0
  %614 = vmatpush1.msra.mxu0 0.0
  %615 = vmatprep.mubr.f32.mxu0 0.0
  %616 = vmatmul.mubr.f32.gmra.mrb[0].mxu0 %v528
  %v617 = vpop.f32.mrb[0].mxu0
  %v618 = vadd.f32 0.0, %v617
  %v619 = vpop.f32.mrb[0].mxu0
  %620 = vmatprep.mubr.f32.mxu0 0.0
  %621 = vmatmul.mubr.f32.gmra.mrb[0].mxu0 %v531
  %v622 = vpop.f32.mrb[0].mxu0
  %v623 = vadd.f32 0.0, %v622
  %v624 = vpop.f32.mrb[0].mxu0
  %625 = vmatprep.mubr.f32.mxu0 0.0
  %626 = vmatmul.mubr.f32.gmra.mrb[0].mxu0 %v534
  %v627 = vpop.f32.mrb[0].mxu0
  %v628 = vadd.f32 0.0, %v627
  %v629 = vpop.f32.mrb[0].mxu0
  %630 = vmatprep.mubr.f32.mxu0 0.0
  %631 = vmatmul.mubr.f32.gmra.mrb[0].mxu0 %v537
  %v632 = vpop.f32.mrb[0].mxu0
  %v633 = vadd.f32 0.0, %v632
  %v634 = vpop.f32.mrb[0].mxu0
  %635 = vmatprep.mubr.f32.mxu0 0.0
  %636 = vmatmul.mubr.f32.gmra.mrb[0].mxu0 %v540
  %v637 = vpop.f32.mrb[0].mxu0
  %v638 = vadd.f32 0.0, %v637
  %v639 = vpop.f32.mrb[0].mxu0
  %640 = vmatprep.mubr.f32.mxu0 0.0
  %641 = vmatmul.mubr.f32.gmra.mrb[0].mxu0 %v543
  %v642 = vpop.f32.mrb[0].mxu0
  %v643 = vadd.f32 0.0, %v642
  %v644 = vpop.f32.mrb[0].mxu0
  %645 = vmatprep.mubr.f32.mxu0 0.0
  %646 = vmatmul.mubr.f32.gmra.mrb[0].mxu0 %v546
  %v647 = vpop.f32.mrb[0].mxu0
  %v648 = vadd.f32 0.0, %v647
  %v649 = vpop.f32.mrb[0].mxu0
  %650 = vmatprep.mubr.f32.mxu0 0.0
  %651 = vmatmul.mubr.f32.gmra.mrb[0].mxu0 %v549
  %v652 = vpop.f32.mrb[0].mxu0
  %v653 = vadd.f32 0.0, %v652
  %v654 = vpop.f32.mrb[0].mxu0
  %655 = vdwg.mxu0
  %v657 = vsel %vm249, %v371, 0
  %v660 = vsel %vm249, %v372, 0
  %v663 = vsel %vm249, %v373, 0
  %v666 = vsel %vm249, %v374, 0
  %v669 = vsel %vm249, %v375, 0
  %v672 = vsel %vm249, %v376, 0
  %v675 = vsel %vm249, %v377, 0
  %v678 = vsel %vm249, %v378, 0
  %680 = vmatprep.subr.mxu0 0.0
  %681 = vmatpush1.msra.mxu0 %v522
  %682 = vmatprep.subr.mxu0 0.0
  %683 = vmatpush1.msra.mxu0 %v523
  %684 = vmatprep.subr.mxu0 0.0
  %685 = vmatpush1.msra.mxu0 %v524
  %686 = vmatprep.subr.mxu0 0.0
  %687 = vmatpush1.msra.mxu0 %v525
  %688 = vmatprep.subr.mxu0 0.0
  %689 = vmatpush1.msra.mxu0 0.0
  %690 = vmatprep.subr.mxu0 0.0
  %691 = vmatpush1.msra.mxu0 0.0
  %692 = vmatprep.subr.mxu0 0.0
  %693 = vmatpush1.msra.mxu0 0.0
  %694 = vmatprep.subr.mxu0 0.0
  %695 = vmatpush1.msra.mxu0 0.0
  %696 = vmatprep.subr.mxu0 0.0
  %697 = vmatpush1.msra.mxu0 0.0
  %698 = vmatprep.subr.mxu0 0.0
  %699 = vmatpush1.msra.mxu0 0.0
  %700 = vmatprep.subr.mxu0 0.0
  %701 = vmatpush1.msra.mxu0 0.0
  %702 = vmatprep.subr.mxu0 0.0
  %703 = vmatpush1.msra.mxu0 0.0
  %704 = vmatprep.subr.mxu0 0.0
  %705 = vmatpush1.msra.mxu0 0.0
  %706 = vmatprep.subr.mxu0 0.0
  %707 = vmatpush1.msra.mxu0 0.0
  %708 = vmatprep.subr.mxu0 0.0
  %709 = vmatpush1.msra.mxu0 0.0
  %710 = vmatprep.subr.mxu0 0.0
  %711 = vmatpush1.msra.mxu0 0.0
  %712 = vmatprep.subr.mxu0 0.0
  %713 = vmatpush1.msra.mxu0 0.0
  %714 = vmatprep.subr.mxu0 0.0
  %715 = vmatpush1.msra.mxu0 0.0
  %716 = vmatprep.subr.mxu0 0.0
  %717 = vmatpush1.msra.mxu0 0.0
  %718 = vmatprep.subr.mxu0 0.0
  %719 = vmatpush1.msra.mxu0 0.0
  %720 = vmatprep.subr.mxu0 0.0
  %721 = vmatpush1.msra.mxu0 0.0
  %722 = vmatprep.subr.mxu0 0.0
  %723 = vmatpush1.msra.mxu0 0.0
  %724 = vmatprep.subr.mxu0 0.0
  %725 = vmatpush1.msra.mxu0 0.0
  %726 = vmatprep.subr.mxu0 0.0
  %727 = vmatpush1.msra.mxu0 0.0
  %728 = vmatprep.subr.mxu0 0.0
  %729 = vmatpush1.msra.mxu0 0.0
  %730 = vmatprep.subr.mxu0 0.0
  %731 = vmatpush1.msra.mxu0 0.0
  %732 = vmatprep.subr.mxu0 0.0
  %733 = vmatpush1.msra.mxu0 0.0
  %734 = vmatprep.subr.mxu0 0.0
  %735 = vmatpush1.msra.mxu0 0.0
  %736 = vmatprep.subr.mxu0 0.0
  %737 = vmatpush1.msra.mxu0 0.0
  %738 = vmatprep.subr.mxu0 0.0
  %739 = vmatpush1.msra.mxu0 0.0
  %740 = vmatprep.subr.mxu0 0.0
  %741 = vmatpush1.msra.mxu0 0.0
  %742 = vmatprep.subr.mxu0 0.0
  %743 = vmatpush1.msra.mxu0 0.0
  %744 = vmatprep.mubr.f32.mxu0 0.0
  %745 = vmatmul.mubr.f32.gmra.mrb[0].mxu0 %v657
  %v746 = vpop.f32.mrb[0].mxu0
  %v747 = vadd.f32 0.0, %v746
  %v748 = vpop.f32.mrb[0].mxu0
  %749 = vmatprep.mubr.f32.mxu0 0.0
  %750 = vmatmul.mubr.f32.gmra.mrb[0].mxu0 %v660
  %v751 = vpop.f32.mrb[0].mxu0
  %v752 = vadd.f32 0.0, %v751
  %v753 = vpop.f32.mrb[0].mxu0
  %754 = vmatprep.mubr.f32.mxu0 0.0
  %755 = vmatmul.mubr.f32.gmra.mrb[0].mxu0 %v663
  %v756 = vpop.f32.mrb[0].mxu0
  %v757 = vadd.f32 0.0, %v756
  %v758 = vpop.f32.mrb[0].mxu0
  %759 = vmatprep.mubr.f32.mxu0 0.0
  %760 = vmatmul.mubr.f32.gmra.mrb[0].mxu0 %v666
  %v761 = vpop.f32.mrb[0].mxu0
  %v762 = vadd.f32 0.0, %v761
  %v763 = vpop.f32.mrb[0].mxu0
  %764 = vmatprep.mubr.f32.mxu0 0.0
  %765 = vmatmul.mubr.f32.gmra.mrb[0].mxu0 %v669
  %v766 = vpop.f32.mrb[0].mxu0
  %v767 = vadd.f32 0.0, %v766
  %v768 = vpop.f32.mrb[0].mxu0
  %769 = vmatprep.mubr.f32.mxu0 0.0
  %770 = vmatmul.mubr.f32.gmra.mrb[0].mxu0 %v672
  %v771 = vpop.f32.mrb[0].mxu0
  %v772 = vadd.f32 0.0, %v771
  %v773 = vpop.f32.mrb[0].mxu0
  %774 = vmatprep.mubr.f32.mxu0 0.0
  %775 = vmatmul.mubr.f32.gmra.mrb[0].mxu0 %v675
  %v776 = vpop.f32.mrb[0].mxu0
  %v777 = vadd.f32 0.0, %v776
  %v778 = vpop.f32.mrb[0].mxu0
  %779 = vmatprep.mubr.f32.mxu0 0.0
  %780 = vmatmul.mubr.f32.gmra.mrb[0].mxu0 %v678
  %v781 = vpop.f32.mrb[0].mxu0
  %v782 = vadd.f32 0.0, %v781
  %v783 = vpop.f32.mrb[0].mxu0
  %784 = vdwg.mxu0
  %v786 = vsel %vm249, %v618, 0
  %v789 = vsel %vm249, %v623, 0
  %v792 = vsel %vm249, %v628, 0
  %v795 = vsel %vm249, %v633, 0
  %v798 = vsel %vm249, %v638, 0
  %v801 = vsel %vm249, %v643, 0
  %v804 = vsel %vm249, %v648, 0
  %v807 = vsel %vm249, %v653, 0
  %809 = vmatprep.subr.mxu0 0.0
  %810 = vmatpush1.msra.mxu0 %v518
  %811 = vmatprep.subr.mxu0 0.0
  %812 = vmatpush1.msra.mxu0 %v519
  %813 = vmatprep.subr.mxu0 0.0
  %814 = vmatpush1.msra.mxu0 %v520
  %815 = vmatprep.subr.mxu0 0.0
  %816 = vmatpush1.msra.mxu0 %v521
  %817 = vmatprep.subr.mxu0 0.0
  %818 = vmatpush1.msra.mxu0 0.0
  %819 = vmatprep.subr.mxu0 0.0
  %820 = vmatpush1.msra.mxu0 0.0
  %821 = vmatprep.subr.mxu0 0.0
  %822 = vmatpush1.msra.mxu0 0.0
  %823 = vmatprep.subr.mxu0 0.0
  %824 = vmatpush1.msra.mxu0 0.0
  %825 = vmatprep.subr.mxu0 0.0
  %826 = vmatpush1.msra.mxu0 0.0
  %827 = vmatprep.subr.mxu0 0.0
  %828 = vmatpush1.msra.mxu0 0.0
  %829 = vmatprep.subr.mxu0 0.0
  %830 = vmatpush1.msra.mxu0 0.0
  %831 = vmatprep.subr.mxu0 0.0
  %832 = vmatpush1.msra.mxu0 0.0
  %833 = vmatprep.subr.mxu0 0.0
  %834 = vmatpush1.msra.mxu0 0.0
  %835 = vmatprep.subr.mxu0 0.0
  %836 = vmatpush1.msra.mxu0 0.0
  %837 = vmatprep.subr.mxu0 0.0
  %838 = vmatpush1.msra.mxu0 0.0
  %839 = vmatprep.subr.mxu0 0.0
  %840 = vmatpush1.msra.mxu0 0.0
  %841 = vmatprep.subr.mxu0 0.0
  %842 = vmatpush1.msra.mxu0 0.0
  %843 = vmatprep.subr.mxu0 0.0
  %844 = vmatpush1.msra.mxu0 0.0
  %845 = vmatprep.subr.mxu0 0.0
  %846 = vmatpush1.msra.mxu0 0.0
  %847 = vmatprep.subr.mxu0 0.0
  %848 = vmatpush1.msra.mxu0 0.0
  %849 = vmatprep.subr.mxu0 0.0
  %850 = vmatpush1.msra.mxu0 0.0
  %851 = vmatprep.subr.mxu0 0.0
  %852 = vmatpush1.msra.mxu0 0.0
  %853 = vmatprep.subr.mxu0 0.0
  %854 = vmatpush1.msra.mxu0 0.0
  %855 = vmatprep.subr.mxu0 0.0
  %856 = vmatpush1.msra.mxu0 0.0
  %857 = vmatprep.subr.mxu0 0.0
  %858 = vmatpush1.msra.mxu0 0.0
  %859 = vmatprep.subr.mxu0 0.0
  %860 = vmatpush1.msra.mxu0 0.0
  %861 = vmatprep.subr.mxu0 0.0
  %862 = vmatpush1.msra.mxu0 0.0
  %863 = vmatprep.subr.mxu0 0.0
  %864 = vmatpush1.msra.mxu0 0.0
  %865 = vmatprep.subr.mxu0 0.0
  %866 = vmatpush1.msra.mxu0 0.0
  %867 = vmatprep.subr.mxu0 0.0
  %868 = vmatpush1.msra.mxu0 0.0
  %869 = vmatprep.subr.mxu0 0.0
  %870 = vmatpush1.msra.mxu0 0.0
  %871 = vmatprep.subr.mxu0 0.0
  %872 = vmatpush1.msra.mxu0 0.0
  %873 = vmatprep.mubr.f32.mxu0 0.0
  %874 = vmatmul.mubr.f32.gmra.mrb[0].mxu0 %v786
  %v875 = vpop.f32.mrb[0].mxu0
  %v876 = vadd.f32 %v747, %v875
  %v877 = vpop.f32.mrb[0].mxu0
  %878 = vmatprep.mubr.f32.mxu0 0.0
  %879 = vmatmul.mubr.f32.gmra.mrb[0].mxu0 %v789
  %v880 = vpop.f32.mrb[0].mxu0
  %v881 = vadd.f32 %v752, %v880
  %v882 = vpop.f32.mrb[0].mxu0
  %883 = vmatprep.mubr.f32.mxu0 0.0
  %884 = vmatmul.mubr.f32.gmra.mrb[0].mxu0 %v792
  %v885 = vpop.f32.mrb[0].mxu0
  %v886 = vadd.f32 %v757, %v885
  %v887 = vpop.f32.mrb[0].mxu0
  %888 = vmatprep.mubr.f32.mxu0 0.0
  %889 = vmatmul.mubr.f32.gmra.mrb[0].mxu0 %v795
  %v890 = vpop.f32.mrb[0].mxu0
  %v891 = vadd.f32 %v762, %v890
  %v892 = vpop.f32.mrb[0].mxu0
  %893 = vmatprep.mubr.f32.mxu0 0.0
  %894 = vmatmul.mubr.f32.gmra.mrb[0].mxu0 %v798
  %v895 = vpop.f32.mrb[0].mxu0
  %v896 = vadd.f32 %v767, %v895
  %v897 = vpop.f32.mrb[0].mxu0
  %898 = vmatprep.mubr.f32.mxu0 0.0
  %899 = vmatmul.mubr.f32.gmra.mrb[0].mxu0 %v801
  %v900 = vpop.f32.mrb[0].mxu0
  %v901 = vadd.f32 %v772, %v900
  %v902 = vpop.f32.mrb[0].mxu0
  %903 = vmatprep.mubr.f32.mxu0 0.0
  %904 = vmatmul.mubr.f32.gmra.mrb[0].mxu0 %v804
  %v905 = vpop.f32.mrb[0].mxu0
  %v906 = vadd.f32 %v777, %v905
  %v907 = vpop.f32.mrb[0].mxu0
  %908 = vmatprep.mubr.f32.mxu0 0.0
  %909 = vmatmul.mubr.f32.gmra.mrb[0].mxu0 %v807
  %v910 = vpop.f32.mrb[0].mxu0
  %v911 = vadd.f32 %v782, %v910
  %v912 = vpop.f32.mrb[0].mxu0
  %913 = vdwg.mxu0
  %v914 = vlaneseq
  %v915 = vshrl.u32 %v914, 7
  %v916 = vsub.s32 2, %v915
  %v917 = vrot.slane %v21, %v916
  %v918 = vadd.f32 %v876, %v917
  %v919 = vadd.f32 %v881, %v917
  %v920 = vadd.f32 %v886, %v917
  %v921 = vadd.f32 %v891, %v917
  %v922 = vadd.f32 %v896, %v917
  %v923 = vadd.f32 %v901, %v917
  %v924 = vadd.f32 %v906, %v917
  %v925 = vadd.f32 %v911, %v917
  %v926 = vmax.f32 %v918, 0.0
  %v927 = vmax.f32 %v919, 0.0
  %v928 = vmax.f32 %v920, 0.0
  %v929 = vmax.f32 %v921, 0.0
  %v930 = vmax.f32 %v922, 0.0
  %v931 = vmax.f32 %v923, 0.0
  %v932 = vmax.f32 %v924, 0.0
  %v933 = vmax.f32 %v925, 0.0
  %v934 = vadd.f32 %v926, %v371
  %v935 = vadd.f32 %v927, %v372
  %v936 = vadd.f32 %v928, %v373
  %v937 = vadd.f32 %v929, %v374
  %v938 = vadd.f32 %v930, %v375
  %v939 = vadd.f32 %v931, %v376
  %v940 = vadd.f32 %v932, %v377
  %v941 = vadd.f32 %v933, %v378
  %v942 = vsel %vm249, %v934, 0.0
  %943 = vadd.xlane.f32.xlu0 %v942
  %v944 = vpop.xlane.xlu0 %943
  %v945 = vsel %vm249, %v935, 0.0
  %946 = vadd.xlane.f32.xlu0 %v945
  %v947 = vpop.xlane.xlu0 %946
  %v948 = vsel %vm249, %v936, 0.0
  %949 = vadd.xlane.f32.xlu0 %v948
  %v950 = vpop.xlane.xlu0 %949
  %v951 = vsel %vm249, %v937, 0.0
  %952 = vadd.xlane.f32.xlu0 %v951
  %v953 = vpop.xlane.xlu0 %952
  %v954 = vsel %vm249, %v938, 0.0
  %955 = vadd.xlane.f32.xlu0 %v954
  %v956 = vpop.xlane.xlu0 %955
  %v957 = vsel %vm249, %v939, 0.0
  %958 = vadd.xlane.f32.xlu0 %v957
  %v959 = vpop.xlane.xlu0 %958
  %v960 = vsel %vm249, %v940, 0.0
  %961 = vadd.xlane.f32.xlu0 %v960
  %v962 = vpop.xlane.xlu0 %961
  %v963 = vsel %vm249, %v941, 0.0
  %964 = vadd.xlane.f32.xlu0 %v963
  %v965 = vpop.xlane.xlu0 %964
  %v966 = vmul.f32 %v944, %v274
  %v967 = vmul.f32 %v947, %v274
  %v968 = vmul.f32 %v950, %v274
  %v969 = vmul.f32 %v953, %v274
  %v970 = vmul.f32 %v956, %v274
  %v971 = vmul.f32 %v959, %v274
  %v972 = vmul.f32 %v962, %v274
  %v973 = vmul.f32 %v965, %v274
  %v974 = vsub.f32 %v934, %v966
  %v975 = vsub.f32 %v935, %v967
  %v976 = vsub.f32 %v936, %v968
  %v977 = vsub.f32 %v937, %v969
  %v978 = vsub.f32 %v938, %v970
  %v979 = vsub.f32 %v939, %v971
  %v980 = vsub.f32 %v940, %v972
  %v981 = vsub.f32 %v941, %v973
  %v982 = vmul.f32 %v974, %v974
  %v983 = vmul.f32 %v975, %v975
  %v984 = vmul.f32 %v976, %v976
  %v985 = vmul.f32 %v977, %v977
  %v986 = vmul.f32 %v978, %v978
  %v987 = vmul.f32 %v979, %v979
  %v988 = vmul.f32 %v980, %v980
  %v989 = vmul.f32 %v981, %v981
  %v990 = vsel %vm249, %v982, 0.0
  %991 = vadd.xlane.f32.xlu0 %v990
  %v992 = vpop.xlane.xlu0 %991
  %v993 = vsel %vm249, %v983, 0.0
  %994 = vadd.xlane.f32.xlu0 %v993
  %v995 = vpop.xlane.xlu0 %994
  %v996 = vsel %vm249, %v984, 0.0
  %997 = vadd.xlane.f32.xlu0 %v996
  %v998 = vpop.xlane.xlu0 %997
  %v999 = vsel %vm249, %v985, 0.0
  %1000 = vadd.xlane.f32.xlu0 %v999
  %v1001 = vpop.xlane.xlu0 %1000
  %v1002 = vsel %vm249, %v986, 0.0
  %1003 = vadd.xlane.f32.xlu0 %v1002
  %v1004 = vpop.xlane.xlu0 %1003
  %v1005 = vsel %vm249, %v987, 0.0
  %1006 = vadd.xlane.f32.xlu0 %v1005
  %v1007 = vpop.xlane.xlu0 %1006
  %v1008 = vsel %vm249, %v988, 0.0
  %1009 = vadd.xlane.f32.xlu0 %v1008
  %v1010 = vpop.xlane.xlu0 %1009
  %v1011 = vsel %vm249, %v989, 0.0
  %1012 = vadd.xlane.f32.xlu0 %v1011
  %v1013 = vpop.xlane.xlu0 %1012
  %v1014 = vmul.f32 %v992, %v274
  %v1015 = vmul.f32 %v995, %v274
  %v1016 = vmul.f32 %v998, %v274
  %v1017 = vmul.f32 %v1001, %v274
  %v1018 = vmul.f32 %v1004, %v274
  %v1019 = vmul.f32 %v1007, %v274
  %v1020 = vmul.f32 %v1010, %v274
  %v1021 = vmul.f32 %v1013, %v274
  %v1022 = vadd.f32 %v1014, 1e-05
  %v1023 = vadd.f32 %v1015, 1e-05
  %v1024 = vadd.f32 %v1016, 1e-05
  %v1025 = vadd.f32 %v1017, 1e-05
  %v1026 = vadd.f32 %v1018, 1e-05
  %v1027 = vadd.f32 %v1019, 1e-05
  %v1028 = vadd.f32 %v1020, 1e-05
  %v1029 = vadd.f32 %v1021, 1e-05
  %v1030 = vrsqrt.pop %v1022
  %v1031 = vrsqrt.pop %v1023
  %v1032 = vrsqrt.pop %v1024
  %v1033 = vrsqrt.pop %v1025
  %v1034 = vrsqrt.pop %v1026
  %v1035 = vrsqrt.pop %v1027
  %v1036 = vrsqrt.pop %v1028
  %v1037 = vrsqrt.pop %v1029
  %v1038 = vmul.f32 %v974, %v1030
  %v1039 = vmul.f32 %v975, %v1031
  %v1040 = vmul.f32 %v976, %v1032
  %v1041 = vmul.f32 %v977, %v1033
  %v1042 = vmul.f32 %v978, %v1034
  %v1043 = vmul.f32 %v979, %v1035
  %v1044 = vmul.f32 %v980, %v1036
  %v1045 = vmul.f32 %v981, %v1037
  %v1046 = vlaneseq
  %v1047 = vshrl.u32 %v1046, 7
  %v1048 = vsub.s32 3, %v1047
  %v1049 = vrot.slane %v21, %v1048
  %v1050 = vmul.f32 %v1038, %v1049
  %v1051 = vmul.f32 %v1039, %v1049
  %v1052 = vmul.f32 %v1040, %v1049
  %v1053 = vmul.f32 %v1041, %v1049
  %v1054 = vmul.f32 %v1042, %v1049
  %v1055 = vmul.f32 %v1043, %v1049
  %v1056 = vmul.f32 %v1044, %v1049
  %v1057 = vmul.f32 %v1045, %v1049
  %v1058 = vlaneseq
  %v1059 = vshrl.u32 %v1058, 7
  %v1060 = vsub.s32 4, %v1059
  %v1061 = vrot.slane %v21, %v1060
  %v1062 = vadd.f32 %v1050, %v1061
  %v1063 = vadd.f32 %v1051, %v1061
  %v1064 = vadd.f32 %v1052, %v1061
  %v1065 = vadd.f32 %v1053, %v1061
  %v1066 = vadd.f32 %v1054, %v1061
  %v1067 = vadd.f32 %v1055, %v1061
  %v1068 = vadd.f32 %v1056, %v1061
  %v1069 = vadd.f32 %v1057, %v1061
  %v1070 = vld [vmem:[%s3 + $0x40] sm:$0xff]
  %v1071 = vld [vmem:[%s3 + $0x48] sm:$0xff]
  %v1072 = vld [vmem:[%s3 + $0x50] sm:$0xff]
  %v1073 = vld [vmem:[%s3 + $0x58] sm:$0xff]
  %v1074 = vld [vmem:[%s3 + $0x60] sm:$0xff]
  %v1075 = vld [vmem:[%s3 + $0x68] sm:$0xff]
  %v1076 = vld [vmem:[%s3 + $0x70] sm:$0xff]
  %v1077 = vld [vmem:[%s3 + $0x78] sm:$0xff]
  %1078 = vmatprep.subr.mxu0 0.0
  %1079 = vmatpush1.msra.mxu0 %v1062
  %1080 = vmatprep.subr.mxu0 0.0
  %1081 = vmatpush1.msra.mxu0 %v1063
  %1082 = vmatprep.subr.mxu0 0.0
  %1083 = vmatpush1.msra.mxu0 %v1064
  %1084 = vmatprep.subr.mxu0 0.0
  %1085 = vmatpush1.msra.mxu0 %v1065
  %1086 = vmatprep.subr.mxu0 0.0
  %1087 = vmatpush1.msra.mxu0 %v1066
  %1088 = vmatprep.subr.mxu0 0.0
  %1089 = vmatpush1.msra.mxu0 %v1067
  %1090 = vmatprep.subr.mxu0 0.0
  %1091 = vmatpush1.msra.mxu0 %v1068
  %1092 = vmatprep.subr.mxu0 0.0
  %1093 = vmatpush1.msra.mxu0 %v1069
  %1094 = vmatprep.subr.mxu0 0.0
  %1095 = vmatpush1.msra.mxu0 0.0
  %1096 = vmatprep.subr.mxu0 0.0
  %1097 = vmatpush1.msra.mxu0 0.0
  %1098 = vmatprep.subr.mxu0 0.0
  %1099 = vmatpush1.msra.mxu0 0.0
  %1100 = vmatprep.subr.mxu0 0.0
  %1101 = vmatpush1.msra.mxu0 0.0
  %1102 = vmatprep.subr.mxu0 0.0
  %1103 = vmatpush1.msra.mxu0 0.0
  %1104 = vmatprep.subr.mxu0 0.0
  %1105 = vmatpush1.msra.mxu0 0.0
  %1106 = vmatprep.subr.mxu0 0.0
  %1107 = vmatpush1.msra.mxu0 0.0
  %1108 = vmatprep.subr.mxu0 0.0
  %1109 = vmatpush1.msra.mxu0 0.0
  %1110 = vmatprep.subr.mxu0 0.0
  %1111 = vmatpush1.msra.mxu0 0.0
  %1112 = vmatprep.subr.mxu0 0.0
  %1113 = vmatpush1.msra.mxu0 0.0
  %1114 = vmatprep.subr.mxu0 0.0
  %1115 = vmatpush1.msra.mxu0 0.0
  %1116 = vmatprep.subr.mxu0 0.0
  %1117 = vmatpush1.msra.mxu0 0.0
  %1118 = vmatprep.subr.mxu0 0.0
  %1119 = vmatpush1.msra.mxu0 0.0
  %1120 = vmatprep.subr.mxu0 0.0
  %1121 = vmatpush1.msra.mxu0 0.0
  %1122 = vmatprep.subr.mxu0 0.0
  %1123 = vmatpush1.msra.mxu0 0.0
  %1124 = vmatprep.subr.mxu0 0.0
  %1125 = vmatpush1.msra.mxu0 0.0
  %1126 = vmatprep.subr.mxu0 0.0
  %1127 = vmatpush1.msra.mxu0 0.0
  %1128 = vmatprep.subr.mxu0 0.0
  %1129 = vmatpush1.msra.mxu0 0.0
  %1130 = vmatprep.subr.mxu0 0.0
  %1131 = vmatpush1.msra.mxu0 0.0
  %1132 = vmatprep.subr.mxu0 0.0
  %1133 = vmatpush1.msra.mxu0 0.0
  %1134 = vmatprep.subr.mxu0 0.0
  %1135 = vmatpush1.msra.mxu0 0.0
  %1136 = vmatprep.subr.mxu0 0.0
  %1137 = vmatpush1.msra.mxu0 0.0
  %1138 = vmatprep.subr.mxu0 0.0
  %1139 = vmatpush1.msra.mxu0 0.0
  %1140 = vmatprep.subr.mxu0 0.0
  %1141 = vmatpush1.msra.mxu0 0.0
  %1142 = vmatprep.mubr.f32.mxu0 0.0
  %1143 = vmatmul.mubr.f32.gmra.mrb[0].mxu0 %v528
  %v1144 = vpop.f32.mrb[0].mxu0
  %v1145 = vadd.f32 0.0, %v1144
  %v1146 = vpop.f32.mrb[0].mxu0
  %1147 = vmatprep.mubr.f32.mxu0 0.0
  %1148 = vmatmul.mubr.f32.gmra.mrb[0].mxu0 %v531
  %v1149 = vpop.f32.mrb[0].mxu0
  %v1150 = vadd.f32 0.0, %v1149
  %v1151 = vpop.f32.mrb[0].mxu0
  %1152 = vmatprep.mubr.f32.mxu0 0.0
  %1153 = vmatmul.mubr.f32.gmra.mrb[0].mxu0 %v534
  %v1154 = vpop.f32.mrb[0].mxu0
  %v1155 = vadd.f32 0.0, %v1154
  %v1156 = vpop.f32.mrb[0].mxu0
  %1157 = vmatprep.mubr.f32.mxu0 0.0
  %1158 = vmatmul.mubr.f32.gmra.mrb[0].mxu0 %v537
  %v1159 = vpop.f32.mrb[0].mxu0
  %v1160 = vadd.f32 0.0, %v1159
  %v1161 = vpop.f32.mrb[0].mxu0
  %1162 = vmatprep.mubr.f32.mxu0 0.0
  %1163 = vmatmul.mubr.f32.gmra.mrb[0].mxu0 %v540
  %v1164 = vpop.f32.mrb[0].mxu0
  %v1165 = vadd.f32 0.0, %v1164
  %v1166 = vpop.f32.mrb[0].mxu0
  %1167 = vmatprep.mubr.f32.mxu0 0.0
  %1168 = vmatmul.mubr.f32.gmra.mrb[0].mxu0 %v543
  %v1169 = vpop.f32.mrb[0].mxu0
  %v1170 = vadd.f32 0.0, %v1169
  %v1171 = vpop.f32.mrb[0].mxu0
  %1172 = vmatprep.mubr.f32.mxu0 0.0
  %1173 = vmatmul.mubr.f32.gmra.mrb[0].mxu0 %v546
  %v1174 = vpop.f32.mrb[0].mxu0
  %v1175 = vadd.f32 0.0, %v1174
  %v1176 = vpop.f32.mrb[0].mxu0
  %1177 = vmatprep.mubr.f32.mxu0 0.0
  %1178 = vmatmul.mubr.f32.gmra.mrb[0].mxu0 %v549
  %v1179 = vpop.f32.mrb[0].mxu0
  %v1180 = vadd.f32 0.0, %v1179
  %v1181 = vpop.f32.mrb[0].mxu0
  %1182 = vdwg.mxu0
  %v1184 = vsel %vm249, %v1062, 0
  %v1187 = vsel %vm249, %v1063, 0
  %v1190 = vsel %vm249, %v1064, 0
  %v1193 = vsel %vm249, %v1065, 0
  %v1196 = vsel %vm249, %v1066, 0
  %v1199 = vsel %vm249, %v1067, 0
  %v1202 = vsel %vm249, %v1068, 0
  %v1205 = vsel %vm249, %v1069, 0
  %1207 = vmatprep.subr.mxu0 0.0
  %1208 = vmatpush1.msra.mxu0 %v1074
  %1209 = vmatprep.subr.mxu0 0.0
  %1210 = vmatpush1.msra.mxu0 %v1075
  %1211 = vmatprep.subr.mxu0 0.0
  %1212 = vmatpush1.msra.mxu0 %v1076
  %1213 = vmatprep.subr.mxu0 0.0
  %1214 = vmatpush1.msra.mxu0 %v1077
  %1215 = vmatprep.subr.mxu0 0.0
  %1216 = vmatpush1.msra.mxu0 0.0
  %1217 = vmatprep.subr.mxu0 0.0
  %1218 = vmatpush1.msra.mxu0 0.0
  %1219 = vmatprep.subr.mxu0 0.0
  %1220 = vmatpush1.msra.mxu0 0.0
  %1221 = vmatprep.subr.mxu0 0.0
  %1222 = vmatpush1.msra.mxu0 0.0
  %1223 = vmatprep.subr.mxu0 0.0
  %1224 = vmatpush1.msra.mxu0 0.0
  %1225 = vmatprep.subr.mxu0 0.0
  %1226 = vmatpush1.msra.mxu0 0.0
  %1227 = vmatprep.subr.mxu0 0.0
  %1228 = vmatpush1.msra.mxu0 0.0
  %1229 = vmatprep.subr.mxu0 0.0
  %1230 = vmatpush1.msra.mxu0 0.0
  %1231 = vmatprep.subr.mxu0 0.0
  %1232 = vmatpush1.msra.mxu0 0.0
  %1233 = vmatprep.subr.mxu0 0.0
  %1234 = vmatpush1.msra.mxu0 0.0
  %1235 = vmatprep.subr.mxu0 0.0
  %1236 = vmatpush1.msra.mxu0 0.0
  %1237 = vmatprep.subr.mxu0 0.0
  %1238 = vmatpush1.msra.mxu0 0.0
  %1239 = vmatprep.subr.mxu0 0.0
  %1240 = vmatpush1.msra.mxu0 0.0
  %1241 = vmatprep.subr.mxu0 0.0
  %1242 = vmatpush1.msra.mxu0 0.0
  %1243 = vmatprep.subr.mxu0 0.0
  %1244 = vmatpush1.msra.mxu0 0.0
  %1245 = vmatprep.subr.mxu0 0.0
  %1246 = vmatpush1.msra.mxu0 0.0
  %1247 = vmatprep.subr.mxu0 0.0
  %1248 = vmatpush1.msra.mxu0 0.0
  %1249 = vmatprep.subr.mxu0 0.0
  %1250 = vmatpush1.msra.mxu0 0.0
  %1251 = vmatprep.subr.mxu0 0.0
  %1252 = vmatpush1.msra.mxu0 0.0
  %1253 = vmatprep.subr.mxu0 0.0
  %1254 = vmatpush1.msra.mxu0 0.0
  %1255 = vmatprep.subr.mxu0 0.0
  %1256 = vmatpush1.msra.mxu0 0.0
  %1257 = vmatprep.subr.mxu0 0.0
  %1258 = vmatpush1.msra.mxu0 0.0
  %1259 = vmatprep.subr.mxu0 0.0
  %1260 = vmatpush1.msra.mxu0 0.0
  %1261 = vmatprep.subr.mxu0 0.0
  %1262 = vmatpush1.msra.mxu0 0.0
  %1263 = vmatprep.subr.mxu0 0.0
  %1264 = vmatpush1.msra.mxu0 0.0
  %1265 = vmatprep.subr.mxu0 0.0
  %1266 = vmatpush1.msra.mxu0 0.0
  %1267 = vmatprep.subr.mxu0 0.0
  %1268 = vmatpush1.msra.mxu0 0.0
  %1269 = vmatprep.subr.mxu0 0.0
  %1270 = vmatpush1.msra.mxu0 0.0
  %1271 = vmatprep.mubr.f32.mxu0 0.0
  %1272 = vmatmul.mubr.f32.gmra.mrb[0].mxu0 %v1184
  %v1273 = vpop.f32.mrb[0].mxu0
  %v1274 = vadd.f32 0.0, %v1273
  %v1275 = vpop.f32.mrb[0].mxu0
  %1276 = vmatprep.mubr.f32.mxu0 0.0
  %1277 = vmatmul.mubr.f32.gmra.mrb[0].mxu0 %v1187
  %v1278 = vpop.f32.mrb[0].mxu0
  %v1279 = vadd.f32 0.0, %v1278
  %v1280 = vpop.f32.mrb[0].mxu0
  %1281 = vmatprep.mubr.f32.mxu0 0.0
  %1282 = vmatmul.mubr.f32.gmra.mrb[0].mxu0 %v1190
  %v1283 = vpop.f32.mrb[0].mxu0
  %v1284 = vadd.f32 0.0, %v1283
  %v1285 = vpop.f32.mrb[0].mxu0
  %1286 = vmatprep.mubr.f32.mxu0 0.0
  %1287 = vmatmul.mubr.f32.gmra.mrb[0].mxu0 %v1193
  %v1288 = vpop.f32.mrb[0].mxu0
  %v1289 = vadd.f32 0.0, %v1288
  %v1290 = vpop.f32.mrb[0].mxu0
  %1291 = vmatprep.mubr.f32.mxu0 0.0
  %1292 = vmatmul.mubr.f32.gmra.mrb[0].mxu0 %v1196
  %v1293 = vpop.f32.mrb[0].mxu0
  %v1294 = vadd.f32 0.0, %v1293
  %v1295 = vpop.f32.mrb[0].mxu0
  %1296 = vmatprep.mubr.f32.mxu0 0.0
  %1297 = vmatmul.mubr.f32.gmra.mrb[0].mxu0 %v1199
  %v1298 = vpop.f32.mrb[0].mxu0
  %v1299 = vadd.f32 0.0, %v1298
  %v1300 = vpop.f32.mrb[0].mxu0
  %1301 = vmatprep.mubr.f32.mxu0 0.0
  %1302 = vmatmul.mubr.f32.gmra.mrb[0].mxu0 %v1202
  %v1303 = vpop.f32.mrb[0].mxu0
  %v1304 = vadd.f32 0.0, %v1303
  %v1305 = vpop.f32.mrb[0].mxu0
  %1306 = vmatprep.mubr.f32.mxu0 0.0
  %1307 = vmatmul.mubr.f32.gmra.mrb[0].mxu0 %v1205
  %v1308 = vpop.f32.mrb[0].mxu0
  %v1309 = vadd.f32 0.0, %v1308
  %v1310 = vpop.f32.mrb[0].mxu0
  %1311 = vdwg.mxu0
  %v1313 = vsel %vm249, %v1145, 0
  %v1316 = vsel %vm249, %v1150, 0
  %v1319 = vsel %vm249, %v1155, 0
  %v1322 = vsel %vm249, %v1160, 0
  %v1325 = vsel %vm249, %v1165, 0
  %v1328 = vsel %vm249, %v1170, 0
  %v1331 = vsel %vm249, %v1175, 0
  %v1334 = vsel %vm249, %v1180, 0
  %1336 = vmatprep.subr.mxu0 0.0
  %1337 = vmatpush1.msra.mxu0 %v1070
  %1338 = vmatprep.subr.mxu0 0.0
  %1339 = vmatpush1.msra.mxu0 %v1071
  %1340 = vmatprep.subr.mxu0 0.0
  %1341 = vmatpush1.msra.mxu0 %v1072
  %1342 = vmatprep.subr.mxu0 0.0
  %1343 = vmatpush1.msra.mxu0 %v1073
  %1344 = vmatprep.subr.mxu0 0.0
  %1345 = vmatpush1.msra.mxu0 0.0
  %1346 = vmatprep.subr.mxu0 0.0
  %1347 = vmatpush1.msra.mxu0 0.0
  %1348 = vmatprep.subr.mxu0 0.0
  %1349 = vmatpush1.msra.mxu0 0.0
  %1350 = vmatprep.subr.mxu0 0.0
  %1351 = vmatpush1.msra.mxu0 0.0
  %1352 = vmatprep.subr.mxu0 0.0
  %1353 = vmatpush1.msra.mxu0 0.0
  %1354 = vmatprep.subr.mxu0 0.0
  %1355 = vmatpush1.msra.mxu0 0.0
  %1356 = vmatprep.subr.mxu0 0.0
  %1357 = vmatpush1.msra.mxu0 0.0
  %1358 = vmatprep.subr.mxu0 0.0
  %1359 = vmatpush1.msra.mxu0 0.0
  %1360 = vmatprep.subr.mxu0 0.0
  %1361 = vmatpush1.msra.mxu0 0.0
  %1362 = vmatprep.subr.mxu0 0.0
  %1363 = vmatpush1.msra.mxu0 0.0
  %1364 = vmatprep.subr.mxu0 0.0
  %1365 = vmatpush1.msra.mxu0 0.0
  %1366 = vmatprep.subr.mxu0 0.0
  %1367 = vmatpush1.msra.mxu0 0.0
  %1368 = vmatprep.subr.mxu0 0.0
  %1369 = vmatpush1.msra.mxu0 0.0
  %1370 = vmatprep.subr.mxu0 0.0
  %1371 = vmatpush1.msra.mxu0 0.0
  %1372 = vmatprep.subr.mxu0 0.0
  %1373 = vmatpush1.msra.mxu0 0.0
  %1374 = vmatprep.subr.mxu0 0.0
  %1375 = vmatpush1.msra.mxu0 0.0
  %1376 = vmatprep.subr.mxu0 0.0
  %1377 = vmatpush1.msra.mxu0 0.0
  %1378 = vmatprep.subr.mxu0 0.0
  %1379 = vmatpush1.msra.mxu0 0.0
  %1380 = vmatprep.subr.mxu0 0.0
  %1381 = vmatpush1.msra.mxu0 0.0
  %1382 = vmatprep.subr.mxu0 0.0
  %1383 = vmatpush1.msra.mxu0 0.0
  %1384 = vmatprep.subr.mxu0 0.0
  %1385 = vmatpush1.msra.mxu0 0.0
  %1386 = vmatprep.subr.mxu0 0.0
  %1387 = vmatpush1.msra.mxu0 0.0
  %1388 = vmatprep.subr.mxu0 0.0
  %1389 = vmatpush1.msra.mxu0 0.0
  %1390 = vmatprep.subr.mxu0 0.0
  %1391 = vmatpush1.msra.mxu0 0.0
  %1392 = vmatprep.subr.mxu0 0.0
  %1393 = vmatpush1.msra.mxu0 0.0
  %1394 = vmatprep.subr.mxu0 0.0
  %1395 = vmatpush1.msra.mxu0 0.0
  %1396 = vmatprep.subr.mxu0 0.0
  %1397 = vmatpush1.msra.mxu0 0.0
  %1398 = vmatprep.subr.mxu0 0.0
  %1399 = vmatpush1.msra.mxu0 0.0
  %1400 = vmatprep.mubr.f32.mxu0 0.0
  %1401 = vmatmul.mubr.f32.gmra.mrb[0].mxu0 %v1313
  %v1402 = vpop.f32.mrb[0].mxu0
  %v1403 = vadd.f32 %v1274, %v1402
  %v1404 = vpop.f32.mrb[0].mxu0
  %1405 = vmatprep.mubr.f32.mxu0 0.0
  %1406 = vmatmul.mubr.f32.gmra.mrb[0].mxu0 %v1316
  %v1407 = vpop.f32.mrb[0].mxu0
  %v1408 = vadd.f32 %v1279, %v1407
  %v1409 = vpop.f32.mrb[0].mxu0
  %1410 = vmatprep.mubr.f32.mxu0 0.0
  %1411 = vmatmul.mubr.f32.gmra.mrb[0].mxu0 %v1319
  %v1412 = vpop.f32.mrb[0].mxu0
  %v1413 = vadd.f32 %v1284, %v1412
  %v1414 = vpop.f32.mrb[0].mxu0
  %1415 = vmatprep.mubr.f32.mxu0 0.0
  %1416 = vmatmul.mubr.f32.gmra.mrb[0].mxu0 %v1322
  %v1417 = vpop.f32.mrb[0].mxu0
  %v1418 = vadd.f32 %v1289, %v1417
  %v1419 = vpop.f32.mrb[0].mxu0
  %1420 = vmatprep.mubr.f32.mxu0 0.0
  %1421 = vmatmul.mubr.f32.gmra.mrb[0].mxu0 %v1325
  %v1422 = vpop.f32.mrb[0].mxu0
  %v1423 = vadd.f32 %v1294, %v1422
  %v1424 = vpop.f32.mrb[0].mxu0
  %1425 = vmatprep.mubr.f32.mxu0 0.0
  %1426 = vmatmul.mubr.f32.gmra.mrb[0].mxu0 %v1328
  %v1427 = vpop.f32.mrb[0].mxu0
  %v1428 = vadd.f32 %v1299, %v1427
  %v1429 = vpop.f32.mrb[0].mxu0
  %1430 = vmatprep.mubr.f32.mxu0 0.0
  %1431 = vmatmul.mubr.f32.gmra.mrb[0].mxu0 %v1331
  %v1432 = vpop.f32.mrb[0].mxu0
  %v1433 = vadd.f32 %v1304, %v1432
  %v1434 = vpop.f32.mrb[0].mxu0
  %1435 = vmatprep.mubr.f32.mxu0 0.0
  %1436 = vmatmul.mubr.f32.gmra.mrb[0].mxu0 %v1334
  %v1437 = vpop.f32.mrb[0].mxu0
  %v1438 = vadd.f32 %v1309, %v1437
  %v1439 = vpop.f32.mrb[0].mxu0
  %1440 = vdwg.mxu0
  %v1441 = vlaneseq
  %v1442 = vshrl.u32 %v1441, 7
  %v1443 = vsub.s32 5, %v1442
  %v1444 = vrot.slane %v21, %v1443
  %v1445 = vadd.f32 %v1403, %v1444
  %v1446 = vadd.f32 %v1408, %v1444
  %v1447 = vadd.f32 %v1413, %v1444
  %v1448 = vadd.f32 %v1418, %v1444
  %v1449 = vadd.f32 %v1423, %v1444
  %v1450 = vadd.f32 %v1428, %v1444
  %v1451 = vadd.f32 %v1433, %v1444
  %v1452 = vadd.f32 %v1438, %v1444
  %v1453 = vmax.f32 %v1445, 0.0
  %v1454 = vmax.f32 %v1446, 0.0
  %v1455 = vmax.f32 %v1447, 0.0
  %v1456 = vmax.f32 %v1448, 0.0
  %v1457 = vmax.f32 %v1449, 0.0
  %v1458 = vmax.f32 %v1450, 0.0
  %v1459 = vmax.f32 %v1451, 0.0
  %v1460 = vmax.f32 %v1452, 0.0
  %v1461 = vadd.f32 %v1453, %v1062
  %v1462 = vadd.f32 %v1454, %v1063
  %v1463 = vadd.f32 %v1455, %v1064
  %v1464 = vadd.f32 %v1456, %v1065
  %v1465 = vadd.f32 %v1457, %v1066
  %v1466 = vadd.f32 %v1458, %v1067
  %v1467 = vadd.f32 %v1459, %v1068
  %v1468 = vadd.f32 %v1460, %v1069
  %v1469 = vsel %vm249, %v1461, 0.0
  %1470 = vadd.xlane.f32.xlu0 %v1469
  %v1471 = vpop.xlane.xlu0 %1470
  %v1472 = vsel %vm249, %v1462, 0.0
  %1473 = vadd.xlane.f32.xlu0 %v1472
  %v1474 = vpop.xlane.xlu0 %1473
  %v1475 = vsel %vm249, %v1463, 0.0
  %1476 = vadd.xlane.f32.xlu0 %v1475
  %v1477 = vpop.xlane.xlu0 %1476
  %v1478 = vsel %vm249, %v1464, 0.0
  %1479 = vadd.xlane.f32.xlu0 %v1478
  %v1480 = vpop.xlane.xlu0 %1479
  %v1481 = vsel %vm249, %v1465, 0.0
  %1482 = vadd.xlane.f32.xlu0 %v1481
  %v1483 = vpop.xlane.xlu0 %1482
  %v1484 = vsel %vm249, %v1466, 0.0
  %1485 = vadd.xlane.f32.xlu0 %v1484
  %v1486 = vpop.xlane.xlu0 %1485
  %v1487 = vsel %vm249, %v1467, 0.0
  %1488 = vadd.xlane.f32.xlu0 %v1487
  %v1489 = vpop.xlane.xlu0 %1488
  %v1490 = vsel %vm249, %v1468, 0.0
  %1491 = vadd.xlane.f32.xlu0 %v1490
  %v1492 = vpop.xlane.xlu0 %1491
  %v1493 = vmul.f32 %v1471, %v274
  %v1494 = vmul.f32 %v1474, %v274
  %v1495 = vmul.f32 %v1477, %v274
  %v1496 = vmul.f32 %v1480, %v274
  %v1497 = vmul.f32 %v1483, %v274
  %v1498 = vmul.f32 %v1486, %v274
  %v1499 = vmul.f32 %v1489, %v274
  %v1500 = vmul.f32 %v1492, %v274
  %v1501 = vsub.f32 %v1461, %v1493
  %v1502 = vsub.f32 %v1462, %v1494
  %v1503 = vsub.f32 %v1463, %v1495
  %v1504 = vsub.f32 %v1464, %v1496
  %v1505 = vsub.f32 %v1465, %v1497
  %v1506 = vsub.f32 %v1466, %v1498
  %v1507 = vsub.f32 %v1467, %v1499
  %v1508 = vsub.f32 %v1468, %v1500
  %v1509 = vmul.f32 %v1501, %v1501
  %v1510 = vmul.f32 %v1502, %v1502
  %v1511 = vmul.f32 %v1503, %v1503
  %v1512 = vmul.f32 %v1504, %v1504
  %v1513 = vmul.f32 %v1505, %v1505
  %v1514 = vmul.f32 %v1506, %v1506
  %v1515 = vmul.f32 %v1507, %v1507
  %v1516 = vmul.f32 %v1508, %v1508
  %v1517 = vsel %vm249, %v1509, 0.0
  %1518 = vadd.xlane.f32.xlu0 %v1517
  %v1519 = vpop.xlane.xlu0 %1518
  %v1520 = vsel %vm249, %v1510, 0.0
  %1521 = vadd.xlane.f32.xlu0 %v1520
  %v1522 = vpop.xlane.xlu0 %1521
  %v1523 = vsel %vm249, %v1511, 0.0
  %1524 = vadd.xlane.f32.xlu0 %v1523
  %v1525 = vpop.xlane.xlu0 %1524
  %v1526 = vsel %vm249, %v1512, 0.0
  %1527 = vadd.xlane.f32.xlu0 %v1526
  %v1528 = vpop.xlane.xlu0 %1527
  %v1529 = vsel %vm249, %v1513, 0.0
  %1530 = vadd.xlane.f32.xlu0 %v1529
  %v1531 = vpop.xlane.xlu0 %1530
  %v1532 = vsel %vm249, %v1514, 0.0
  %1533 = vadd.xlane.f32.xlu0 %v1532
  %v1534 = vpop.xlane.xlu0 %1533
  %v1535 = vsel %vm249, %v1515, 0.0
  %1536 = vadd.xlane.f32.xlu0 %v1535
  %v1537 = vpop.xlane.xlu0 %1536
  %v1538 = vsel %vm249, %v1516, 0.0
  %1539 = vadd.xlane.f32.xlu0 %v1538
  %v1540 = vpop.xlane.xlu0 %1539
  %v1541 = vmul.f32 %v1519, %v274
  %v1542 = vmul.f32 %v1522, %v274
  %v1543 = vmul.f32 %v1525, %v274
  %v1544 = vmul.f32 %v1528, %v274
  %v1545 = vmul.f32 %v1531, %v274
  %v1546 = vmul.f32 %v1534, %v274
  %v1547 = vmul.f32 %v1537, %v274
  %v1548 = vmul.f32 %v1540, %v274
  %v1549 = vadd.f32 %v1541, 1e-05
  %v1550 = vadd.f32 %v1542, 1e-05
  %v1551 = vadd.f32 %v1543, 1e-05
  %v1552 = vadd.f32 %v1544, 1e-05
  %v1553 = vadd.f32 %v1545, 1e-05
  %v1554 = vadd.f32 %v1546, 1e-05
  %v1555 = vadd.f32 %v1547, 1e-05
  %v1556 = vadd.f32 %v1548, 1e-05
  %v1557 = vrsqrt.pop %v1549
  %v1558 = vrsqrt.pop %v1550
  %v1559 = vrsqrt.pop %v1551
  %v1560 = vrsqrt.pop %v1552
  %v1561 = vrsqrt.pop %v1553
  %v1562 = vrsqrt.pop %v1554
  %v1563 = vrsqrt.pop %v1555
  %v1564 = vrsqrt.pop %v1556
  %v1565 = vmul.f32 %v1501, %v1557
  %v1566 = vmul.f32 %v1502, %v1558
  %v1567 = vmul.f32 %v1503, %v1559
  %v1568 = vmul.f32 %v1504, %v1560
  %v1569 = vmul.f32 %v1505, %v1561
  %v1570 = vmul.f32 %v1506, %v1562
  %v1571 = vmul.f32 %v1507, %v1563
  %v1572 = vmul.f32 %v1508, %v1564
  %v1573 = vlaneseq
  %v1574 = vshrl.u32 %v1573, 7
  %v1575 = vsub.s32 6, %v1574
  %v1576 = vrot.slane %v21, %v1575
  %v1577 = vmul.f32 %v1565, %v1576
  %v1578 = vmul.f32 %v1566, %v1576
  %v1579 = vmul.f32 %v1567, %v1576
  %v1580 = vmul.f32 %v1568, %v1576
  %v1581 = vmul.f32 %v1569, %v1576
  %v1582 = vmul.f32 %v1570, %v1576
  %v1583 = vmul.f32 %v1571, %v1576
  %v1584 = vmul.f32 %v1572, %v1576
  %v1585 = vlaneseq
  %v1586 = vshrl.u32 %v1585, 7
  %v1587 = vsub.s32 7, %v1586
  %v1588 = vrot.slane %v21, %v1587
  %v1589 = vadd.f32 %v1577, %v1588
  %v1590 = vadd.f32 %v1578, %v1588
  %v1591 = vadd.f32 %v1579, %v1588
  %v1592 = vadd.f32 %v1580, %v1588
  %v1593 = vadd.f32 %v1581, %v1588
  %v1594 = vadd.f32 %v1582, %v1588
  %v1595 = vadd.f32 %v1583, %v1588
  %v1596 = vadd.f32 %v1584, %v1588
  %1597 = vst.msk [vmem:[%s5] sm:$0xff] %vm249, %v1589
  %1598 = vst.msk [vmem:[%s5 + $0x8] sm:$0xff] %vm249, %v1590
  %1599 = vst.msk [vmem:[%s5 + $0x10] sm:$0xff] %vm249, %v1591
  %1600 = vst.msk [vmem:[%s5 + $0x18] sm:$0xff] %vm249, %v1592
  %1601 = vst.msk [vmem:[%s5 + $0x20] sm:$0xff] %vm249, %v1593
  %1602 = vst.msk [vmem:[%s5 + $0x28] sm:$0xff] %vm249, %v1594
  %1603 = vst.msk [vmem:[%s5 + $0x30] sm:$0xff] %vm249, %v1595
  %1604 = vst.msk [vmem:[%s5 + $0x38] sm:$0xff] %vm249, %v1596
  // Predicated region
  $region22: #{ast_enc_forward.1} parent=0 // pred_check
    _
  $region23: #{ast_enc_forward.1} parent=0 // pred_check_branch
    %1606 = sbr.rel (0) target = $region25
  $region24: #{ast_enc_forward.1} parent=0 // pred_region
    _
  $region25: #{ast_enc_forward.1} parent=0 // pred_fallthru
    _
  // Predicated region
  $region26: #{ast_enc_forward.1} parent=0 // pred_check
    _
  $region27: #{ast_enc_forward.1} parent=0 // pred_check_branch
    %1608 = sbr.rel (0) target = $region29
  $region28: #{ast_enc_forward.1} parent=0 // pred_region
    _
  $region29: #{ast_enc_forward.1} parent=0 // pred_fallthru
    _

</llo_original>
